<compile_context>
chip_gen: v7x
topology: tpu7x:2x2x1
jax: 0.10.0
libtpu: 0.0.40
codegen_flags: <defaults>
</compile_context>

<pallas_src>
import jax
import jax.numpy as jnp
from jax.experimental import pallas as pl
from jax.experimental.pallas import tpu as pltpu


# ----------------------------- kernels ------------------------------------


def _mlp_kernel_single(x_ref, w1_ref, s1_ref, b1_ref, w2_ref, b2_ref, o_ref):
    """Whole forward in one grid step (small / VMEM-resident V):
       out = sigmoid(relu((x @ W1) * s1 + b1) @ W2 + b2)."""
    # W1 may be int8 (quantized) or bf16; either way the MXU sees bf16 inputs
    # with f32 accumulation.
    acc = jnp.dot(x_ref[...], w1_ref[...].astype(jnp.bfloat16),
                  preferred_element_type=jnp.float32)
    h = jnp.maximum(acc * s1_ref[...] + b1_ref[...], 0.0)
    y = jnp.dot(h.astype(jnp.bfloat16), w2_ref[...],
                preferred_element_type=jnp.float32) + b2_ref[...]
    o_ref[...] = jax.nn.sigmoid(y).astype(o_ref.dtype)


def _mlp_kernel_ktiled(x_ref, w1_ref, s1_ref, b1_ref, w2_ref, b2_ref, o_ref,
                       acc_ref):
    """K-tiled variant for large V. Grid axis 0 = batch ("parallel"),
       axis 1 = vocab/K reduction ("arbitrary", last)."""
    k = pl.program_id(1)

    @pl.when(k == 0)
    def _init():
        acc_ref[...] = jnp.zeros_like(acc_ref)

    acc_ref[...] += jnp.dot(x_ref[...], w1_ref[...].astype(jnp.bfloat16),
                            preferred_element_type=jnp.float32)

    @pl.when(k == pl.num_programs(1) - 1)
    def _finalize():
        # Per-column dequant scale applied once here (amortized over all K steps).
        h = jnp.maximum(acc_ref[...] * s1_ref[...] + b1_ref[...], 0.0)
        y = jnp.dot(h.astype(jnp.bfloat16), w2_ref[...],
                    preferred_element_type=jnp.float32) + b2_ref[...]
        o_ref[...] = jax.nn.sigmoid(y).astype(o_ref.dtype)


# ----------------------------- helpers -------------------------------------


def _round_up(x, m):
    return ((x + m - 1) // m) * m


def _vmem_limit_bytes():
    """Explicit scoped-VMEM limit (default 16/32 MiB caps tile sizes well below
    hardware): ~75% of physical, capped at 100 MiB; 48 MiB fallback."""
    try:
        cap = int(pltpu.get_tpu_info().vmem_capacity_bytes)
    except Exception:
        cap = 64 * 1024 * 1024
    return min(cap * 3 // 4, 100 * 1024 * 1024)


def prepare_params(w1, b1, w2, b2, w1_format="bf16"):
    """One-time parameter prep (hoisted out of the per-call path).

    w1_format="bf16": W1 stored bf16, scale is all-ones.
    w1_format="int8": W1 stored int8 with per-output-column symmetric f32 scale
                      (halves the dominant W1 HBM stream again vs bf16).
    Returns (w1_q, w1_scale(1,H), b1(1,H), w2_bf16, b2(1,T)).
    """
    b1_2d = b1.reshape(1, -1).astype(jnp.float32)
    b2_2d = b2.reshape(1, -1).astype(jnp.float32)
    w2_bf16 = w2.astype(jnp.bfloat16)
    if w1_format == "int8":
        amax = jnp.max(jnp.abs(w1), axis=0, keepdims=True)            # (1, H)
        scale = jnp.where(amax > 0, amax / 127.0, 1.0).astype(jnp.float32)
        w1_q = jnp.clip(jnp.round(w1 / scale), -127, 127).astype(jnp.int8)
        return w1_q, scale, b1_2d, w2_bf16, b2_2d
    ones = jnp.ones((1, w1.shape[1]), jnp.float32)
    return w1.astype(jnp.bfloat16), ones, b1_2d, w2_bf16, b2_2d


# ----------------------------- wrapper --------------------------------------


def simple_nn_forward(x, w1_q, w1_scale, b1_2d, w2_bf16, b2_2d,
                      *, tile_b=512, tile_k=2048):
    B, V = x.shape
    H = w1_q.shape[1]
    T = w2_bf16.shape[1]
    w1_item = jnp.dtype(w1_q.dtype).itemsize

    # --- batch tiling: pad B up (never shrink the tile to 1), tb mult of 16 ---
    tb = min(_round_up(max(tile_b, 16), 16), _round_up(B, 16))
    B_pad = _round_up(B, tb)
    if B_pad // tb < 2 and B_pad >= 32:
        tb = B_pad // 2            # v7x megacore: keep both TensorCores busy

    # --- vocab (K) tiling: tk multiple of 128, pad V up to a multiple of tk ---
    V128 = _round_up(V, 128)
    tk = min(max(128, (tile_k // 128) * 128), V128)
    T_pad = _round_up(T, 128)      # lane-dense (unmasked) output stores

    vmem_limit = _vmem_limit_bytes()
    budget = int(0.6 * vmem_limit)  # headroom for Mosaic internals / spills

    def vmem_need(tk_):
        need = 2 * (tb * tk_ * 2            # x tile (bf16), double-buffered
                    + tk_ * H * w1_item     # W1 slab
                    + H * T_pad * 2         # W2 (constant index, still 2-buffered)
                    + tb * T_pad * 4        # output tile
                    + 2 * H * 4 + T_pad * 4)  # w1_scale, b1, b2
        if tk_ < V128:
            need += tb * H * 4              # f32 accumulator scratch
        return need

    use_single = (tk >= V128) and (vmem_need(V128) <= budget)
    if use_single:
        tk = V128
        V_pad = V128
    else:
        while tk > 128 and vmem_need(tk) > budget:
            tk = max(128, ((tk // 2) // 128) * 128)
        V_pad = _round_up(V, tk)

    nb = B_pad // tb

    # --- pad inputs (zero padding is exact for this forward; sliced off below) ---
    # NOTE: bf16 is exact for integer bag-of-words counts up to 256.
    x_p = jnp.pad(x.astype(jnp.bfloat16), ((0, B_pad - B), (0, V_pad - V)))
    w1_p = jnp.pad(w1_q, ((0, V_pad - V), (0, 0)))
    w2_p = jnp.pad(w2_bf16, ((0, 0), (0, T_pad - T)))
    b2_p = jnp.pad(b2_2d, ((0, 0), (0, T_pad - T)))

    # W1 is re-streamed once per batch tile; output write included.
    cost = pl.CostEstimate(
        flops=2 * B_pad * (V_pad * H + H * T_pad),
        transcendentals=B_pad * T_pad,
        bytes_accessed=(x_p.size * 2
                        + nb * w1_p.size * w1_item
                        + nb * (w2_p.size * 2 + b1_2d.size * 4
                                + b2_p.size * 4 + w1_scale.size * 4)
                        + B_pad * T_pad * 4),
    )
    compiler_params = pltpu.CompilerParams(
        dimension_semantics=("parallel",) if use_single
        else ("parallel", "arbitrary"),
        vmem_limit_bytes=vmem_limit,
    )

    if use_single:
        out_pad = pl.pallas_call(
            _mlp_kernel_single,
            out_shape=jax.ShapeDtypeStruct((B_pad, T_pad), jnp.float32),
            grid_spec=pltpu.PrefetchScalarGridSpec(
                num_scalar_prefetch=0,
                grid=(nb,),
                in_specs=[
                    pl.BlockSpec((tb, V_pad), lambda i: (i, 0)),   # x
                    pl.BlockSpec((V_pad, H), lambda i: (0, 0)),    # W1 (resident)
                    pl.BlockSpec((1, H), lambda i: (0, 0)),        # W1 scale
                    pl.BlockSpec((1, H), lambda i: (0, 0)),        # b1
                    pl.BlockSpec((H, T_pad), lambda i: (0, 0)),    # W2
                    pl.BlockSpec((1, T_pad), lambda i: (0, 0)),    # b2
                ],
                out_specs=pl.BlockSpec((tb, T_pad), lambda i: (i, 0)),
            ),
            compiler_params=compiler_params,
            cost_estimate=cost,
        )(x_p, w1_p, w1_scale, b1_2d, w2_p, b2_p)
    else:
        nk = V_pad // tk
        out_pad = pl.pallas_call(
            _mlp_kernel_ktiled,
            out_shape=jax.ShapeDtypeStruct((B_pad, T_pad), jnp.float32),
            grid_spec=pltpu.PrefetchScalarGridSpec(
                num_scalar_prefetch=0,
                grid=(nb, nk),
                in_specs=[
                    pl.BlockSpec((tb, tk), lambda i, k: (i, k)),   # x tile
                    pl.BlockSpec((tk, H), lambda i, k: (k, 0)),    # W1 K-slab
                    pl.BlockSpec((1, H), lambda i, k: (0, 0)),     # W1 scale
                    pl.BlockSpec((1, H), lambda i, k: (0, 0)),     # b1
                    pl.BlockSpec((H, T_pad), lambda i, k: (0, 0)), # W2
                    pl.BlockSpec((1, T_pad), lambda i, k: (0, 0)), # b2
                ],
                out_specs=pl.BlockSpec((tb, T_pad), lambda i, k: (i, 0)),
                scratch_shapes=[pltpu.VMEM((tb, H), jnp.float32)],
            ),
            compiler_params=compiler_params,
            cost_estimate=cost,
        )(x_p, w1_p, w1_scale, b1_2d, w2_p, b2_p)

    return out_pad[:B, :T]


def init_params(key, vocab_size, hidden, num_tags):
    """PyTorch-style uniform init: U(-1/sqrt(fan_in), 1/sqrt(fan_in))."""
    k1, k2, k3, k4 = jax.random.split(key, 4)
    bound1 = 1.0 / jnp.sqrt(vocab_size)
    bound2 = 1.0 / jnp.sqrt(hidden)
    w1 = jax.random.uniform(k1, (vocab_size, hidden), jnp.float32, -bound1, bound1)
    b1 = jax.random.uniform(k2, (hidden,), jnp.float32, -bound1, bound1)
    w2 = jax.random.uniform(k3, (hidden, num_tags), jnp.float32, -bound2, bound2)
    b2 = jax.random.uniform(k4, (num_tags,), jnp.float32, -bound2, bound2)
    return w1, b1, w2, b2


if __name__ == "__main__":
    # Small synthetic shapes consistent with the module:
    # len(wordVocab)=256, hidden=1024 (fixed), len(tagsVocab)=128.
    BATCH, VOCAB, HIDDEN, TAGS = 8, 256, 1024, 128

    key = jax.random.PRNGKey(0)
    kx, kp = jax.random.split(key)
    # Inputs mimic Vocabulary.get_tensor output: non-negative bag-of-words counts.
    x = jax.random.randint(kx, (BATCH, VOCAB), 0, 3).astype(jnp.float32)
    w1, b1, w2, b2 = init_params(kp, VOCAB, HIDDEN, TAGS)

    # Full-f32 PyTorch-equivalent reference.
    ref_f32 = jax.nn.sigmoid(jnp.maximum(x @ w1 + b1, 0.0) @ w2 + b2)

    # ---- 1) bf16-weight path; demo shapes collapse to a single grid step ----
    w1_bf16, s1_ones, b1_2d, w2_bf16, b2_2d = prepare_params(w1, b1, w2, b2)
    out = jax.block_until_ready(
        simple_nn_forward(x, w1_bf16, s1_ones, b1_2d, w2_bf16, b2_2d))
    assert out.shape == (BATCH, TAGS)

    # Reference mirroring the kernel numerics (bf16 MXU inputs, f32 accumulate).
    xb = x.astype(jnp.bfloat16)
    h_ref = jnp.maximum(
        jnp.dot(xb, w1_bf16, preferred_element_type=jnp.float32) + b1, 0.0)
    ref_bf16 = jax.nn.sigmoid(
        jnp.dot(h_ref.astype(jnp.bfloat16), w2_bf16,
                preferred_element_type=jnp.float32) + b2)
    assert jnp.allclose(out, ref_bf16, atol=2e-3, rtol=2e-3)
    assert jnp.allclose(out, ref_f32, atol=5e-2, rtol=5e-2)

    # ---- 2) force the K-tiled path (tile_k=128 -> 2 K steps) to exercise the
    #         accumulator init/finalize phases ----
    out_kt = jax.block_until_ready(
        simple_nn_forward(x, w1_bf16, s1_ones, b1_2d, w2_bf16, b2_2d,
                          tile_b=512, tile_k=128))
    assert out_kt.shape == (BATCH, TAGS)
    assert jnp.allclose(out_kt, ref_bf16, atol=2e-3, rtol=2e-3)

    # ---- 3) int8-quantized W1 path (per-column scale, dequant at finalize) ----
    w1_i8, s1, b1_2d, w2_bf16, b2_2d = prepare_params(
        w1, b1, w2, b2, w1_format="int8")
    out_q = jax.block_until_ready(
        simple_nn_forward(x, w1_i8, s1, b1_2d, w2_bf16, b2_2d))
    assert out_q.shape == (BATCH, TAGS)
    assert jnp.allclose(out_q, ref_f32, atol=2e-2, rtol=2e-2)

    print("KERNEL_OK")
</pallas_src>

<mosaic_0001>
module attributes {stable_mosaic.version = 11 : i64} {
  func.func @_mlp_kernel_single(%arg0: i32, %arg1: memref<16x256xbf16, #tpu.memory_space<vmem>>, %arg2: memref<256x1024xbf16, #tpu.memory_space<vmem>>, %arg3: memref<1x1024xf32, #tpu.memory_space<vmem>>, %arg4: memref<1x1024xf32, #tpu.memory_space<vmem>>, %arg5: memref<1024x128xbf16, #tpu.memory_space<vmem>>, %arg6: memref<1x128xf32, #tpu.memory_space<vmem>>, %arg7: memref<16x128xf32, #tpu.memory_space<vmem>>) attributes {dimension_semantics = [#tpu.dimension_semantics<parallel>], iteration_bounds = array<i64: 1>, scalar_prefetch = 0 : i64, scratch_operands = 0 : i64, tpu.core_type = #tpu.core_type<tc>, window_params = [{transform_indices = @transform_0, window_bounds = array<i64: 16, 256>}, {pipeline_mode = #tpu.pipeline_mode<synchronous>, transform_indices = @transform_1, window_bounds = array<i64: 256, 1024>}, {pipeline_mode = #tpu.pipeline_mode<synchronous>, transform_indices = @transform_2, window_bounds = array<i64: 1, 1024>}, {pipeline_mode = #tpu.pipeline_mode<synchronous>, transform_indices = @transform_3, window_bounds = array<i64: 1, 1024>}, {pipeline_mode = #tpu.pipeline_mode<synchronous>, transform_indices = @transform_4, window_bounds = array<i64: 1024, 128>}, {pipeline_mode = #tpu.pipeline_mode<synchronous>, transform_indices = @transform_5, window_bounds = array<i64: 1, 128>}, {transform_indices = @transform_6, window_bounds = array<i64: 16, 128>}]} {
    %c0 = arith.constant 0 : index
    %c0_0 = arith.constant 0 : index
    %0 = vector.load %arg1[%c0, %c0_0] : memref<16x256xbf16, #tpu.memory_space<vmem>>, vector<16x256xbf16>
    %c0_1 = arith.constant 0 : index
    %c0_2 = arith.constant 0 : index
    %1 = vector.load %arg2[%c0_1, %c0_2] : memref<256x1024xbf16, #tpu.memory_space<vmem>>, vector<256x1024xbf16>
    %cst = arith.constant dense<0.000000e+00> : vector<16x1024xf32>
    %2 = tpu.matmul %0, %1, %cst {dimension_numbers = #tpu.dot_dimension_numbers<[1], [0], [0], [1], [0, 0, 1, 1], [], []>} : vector<16x256xbf16>, vector<256x1024xbf16>, vector<16x1024xf32> -> vector<16x1024xf32>
    %c0_3 = arith.constant 0 : index
    %c0_4 = arith.constant 0 : index
    %3 = vector.load %arg3[%c0_3, %c0_4] : memref<1x1024xf32, #tpu.memory_space<vmem>>, vector<1x1024xf32>
    %4 = vector.broadcast %3 : vector<1x1024xf32> to vector<16x1024xf32>
    %5 = arith.mulf %2, %4 : vector<16x1024xf32>
    %c0_5 = arith.constant 0 : index
    %c0_6 = arith.constant 0 : index
    %6 = vector.load %arg4[%c0_5, %c0_6] : memref<1x1024xf32, #tpu.memory_space<vmem>>, vector<1x1024xf32>
    %7 = vector.broadcast %6 : vector<1x1024xf32> to vector<16x1024xf32>
    %8 = arith.addf %5, %7 : vector<16x1024xf32>
    %cst_7 = arith.constant 0.000000e+00 : f32
    %9 = vector.broadcast %cst_7 : f32 to vector<16x1024xf32>
    %10 = arith.maximumf %8, %9 : vector<16x1024xf32>
    %11 = arith.truncf %10 : vector<16x1024xf32> to vector<16x1024xbf16>
    %c0_8 = arith.constant 0 : index
    %c0_9 = arith.constant 0 : index
    %12 = vector.load %arg5[%c0_8, %c0_9] : memref<1024x128xbf16, #tpu.memory_space<vmem>>, vector<1024x128xbf16>
    %cst_10 = arith.constant dense<0.000000e+00> : vector<16x128xf32>
    %13 = tpu.matmul %11, %12, %cst_10 {dimension_numbers = #tpu.dot_dimension_numbers<[1], [0], [0], [1], [0, 0, 1, 1], [], []>} : vector<16x1024xbf16>, vector<1024x128xbf16>, vector<16x128xf32> -> vector<16x128xf32>
    %c0_11 = arith.constant 0 : index
    %c0_12 = arith.constant 0 : index
    %14 = vector.load %arg6[%c0_11, %c0_12] : memref<1x128xf32, #tpu.memory_space<vmem>>, vector<1x128xf32>
    %15 = vector.broadcast %14 : vector<1x128xf32> to vector<16x128xf32>
    %16 = arith.addf %13, %15 : vector<16x128xf32>
    %17 = arith.negf %16 : vector<16x128xf32>
    %18 = math.exp %17 : vector<16x128xf32>
    %cst_13 = arith.constant 1.000000e+00 : f32
    %19 = vector.broadcast %cst_13 : f32 to vector<16x128xf32>
    %20 = arith.addf %19, %18 : vector<16x128xf32>
    %21 = arith.divf %19, %20 : vector<16x128xf32>
    %c0_14 = arith.constant 0 : index
    %c0_15 = arith.constant 0 : index
    %22 = vector.load %arg7[%c0_14, %c0_15] : memref<16x128xf32, #tpu.memory_space<vmem>>, vector<16x128xf32>
    tpu.vector_store %arg7[%c0_14, %c0_15], %21 {strides = array<i32>} : memref<16x128xf32, #tpu.memory_space<vmem>>, vector<16x128xf32>,
    return
  }
  func.func @transform_0(%arg0: i32) -> (i32, i32) {
    %c0_i32 = arith.constant 0 : i32
    %c0_i32_0 = arith.constant 0 : i32
    return %arg0, %c0_i32 : i32, i32
  }
  func.func @transform_1(%arg0: i32) -> (i32, i32) {
    %c0_i32 = arith.constant 0 : i32
    %c0_i32_0 = arith.constant 0 : i32
    %c0_i32_1 = arith.constant 0 : i32
    return %c0_i32, %c0_i32_0 : i32, i32
  }
  func.func @transform_2(%arg0: i32) -> (i32, i32) {
    %c0_i32 = arith.constant 0 : i32
    %c0_i32_0 = arith.constant 0 : i32
    %c0_i32_1 = arith.constant 0 : i32
    return %c0_i32, %c0_i32_0 : i32, i32
  }
  func.func @transform_3(%arg0: i32) -> (i32, i32) {
    %c0_i32 = arith.constant 0 : i32
    %c0_i32_0 = arith.constant 0 : i32
    %c0_i32_1 = arith.constant 0 : i32
    return %c0_i32, %c0_i32_0 : i32, i32
  }
  func.func @transform_4(%arg0: i32) -> (i32, i32) {
    %c0_i32 = arith.constant 0 : i32
    %c0_i32_0 = arith.constant 0 : i32
    %c0_i32_1 = arith.constant 0 : i32
    return %c0_i32, %c0_i32_0 : i32, i32
  }
  func.func @transform_5(%arg0: i32) -> (i32, i32) {
    %c0_i32 = arith.constant 0 : i32
    %c0_i32_0 = arith.constant 0 : i32
    %c0_i32_1 = arith.constant 0 : i32
    return %c0_i32, %c0_i32_0 : i32, i32
  }
  func.func @transform_6(%arg0: i32) -> (i32, i32) {
    %c0_i32 = arith.constant 0 : i32
    %c0_i32_0 = arith.constant 0 : i32
    return %arg0, %c0_i32 : i32, i32
  }
}

</mosaic_0001>

<llo_original>
// kernel: tpu_custom_call.1
$region0: #{tpu_custom_call.1}
  #allocation0 [shape = 'u32[]', space=smem, size = 0x4, offset = 0x4, fixed_abs, tag = 'smem constant byte address 0x4 - core index']
  #allocation1 [shape = 'u32[144,128]{1,0:T(1,128)}', space=vmem, size = 0x12000, scoped, tag = 'internal scratch']
  %s0 = inlined_call_operand.hbm [shape: bf16[16,256], index: 0, kind: input, shape index: {}]
  %s1 = inlined_call_operand.hbm [shape: bf16[256,1024], index: 1, kind: input, shape index: {}]
  %s2 = inlined_call_operand.hbm [shape: f32[1,1024], index: 2, kind: input, shape index: {}]
  %s3 = inlined_call_operand.vmem [shape: f32[1,1024], index: 3, kind: input, shape index: {}]
  %s4 = inlined_call_operand.hbm [shape: bf16[1024,128], index: 4, kind: input, shape index: {}]
  %s5 = inlined_call_operand.vmem [shape: f32[1,128], index: 5, kind: input, shape index: {}]
  %s6 = inlined_call_operand.hbm [shape: f32[16,128], index: 6, kind: output, shape index: {}]
  %s7 = sld [smem:[#allocation0]]
  $region50: #{tpu_custom_call.1} parent=0
    _
  %s9 = ssub.s32 1, %s7
  %s10 = scalar_select 0, %s9, %s7
  $region1: #{tpu_custom_call.1} parent=0
    #allocation2 [shape = 'u8[8192]{0}', space=vmem, size = 0x2000, scoped, tag = 'input window, operand 0, single buffered']
    #allocation3 [shape = 's32[1]{0}', space=sflag, size = 0x4, scoped, tag = 'scoped memory for tpu_custom_call.1']
    #allocation4 [shape = 's32[1]{0}', space=sflag, size = 0x4, scoped, tag = 'scoped memory for tpu_custom_call.1']
    #allocation5 [shape = 'u8[524288]{0}', space=vmem, size = 0x80000, scoped, tag = 'input window, operand 1, single buffered']
    #allocation6 [shape = 's32[1]{0}', space=sflag, size = 0x4, scoped, tag = 'scoped memory for tpu_custom_call.1']
    #allocation7 [shape = 'u8[4096]{0}', space=vmem, size = 0x1000, scoped, tag = 'input window, operand 2, single buffered']
    #allocation8 [shape = 'u8[262144]{0}', space=vmem, size = 0x40000, scoped, tag = 'input window, operand 4, single buffered']
    #allocation9 [shape = 's32[1]{0}', space=sflag, size = 0x4, scoped, tag = 'scoped memory for tpu_custom_call.1']
    #allocation10 [shape = 'u8[8192]{0}', space=vmem, size = 0x2000, scoped, tag = 'output window, operand 0, single buffered']
    %11 = vsyncpa [#allocation3], 0
    %12 = vsyncpa [#allocation6], 0
    %13 = vsyncpa [#allocation9], 0
    %14 = vsyncpa [#allocation4], 0
    // Predicated region
    $region2: #{tpu_custom_call.1} parent=1 // pred_check
      _
    $region3: #{tpu_custom_call.1} parent=1 // pred_check_branch
      %16 = sbr.rel (0) target = $region5
    $region4: #{tpu_custom_call.1} parent=1 // pred_region
      %s18 = ssub.s32 256, 256
      %19 = vsyncadd [#allocation3], %s18
      %s20 = sshll.u32 [#allocation2], 4
      %s21 = int_to_ptr.vmem [resolvable:$true] %s20
      %26 = dma.hbm_to_vmem [thread:$0]  %s0, 256, %s21, [#allocation3], 128, 128, 8
    $region5: #{tpu_custom_call.1} parent=1 // pred_fallthru
      _
    // Predicated region
    $region6: #{tpu_custom_call.1} parent=1 // pred_check
      _
    $region7: #{tpu_custom_call.1} parent=1 // pred_check_branch
      %28 = sbr.rel (0) target = $region9
    $region8: #{tpu_custom_call.1} parent=1 // pred_region
      %s30 = ssub.s32 16384, 16384
      %31 = vsyncadd [#allocation6], %s30
      %s32 = sshll.u32 [#allocation5], 4
      %s33 = int_to_ptr.vmem [resolvable:$true] %s32
      %38 = dma.hbm_to_vmem [thread:$0]  %s1, 16384, %s33, [#allocation6], 512, 512, 32
    $region9: #{tpu_custom_call.1} parent=1 // pred_fallthru
      _
    // Predicated region
    $region10: #{tpu_custom_call.1} parent=1 // pred_check
      _
    $region11: #{tpu_custom_call.1} parent=1 // pred_check_branch
      %40 = sbr.rel (0) target = $region13
    $region12: #{tpu_custom_call.1} parent=1 // pred_region
      %s42 = ssub.s32 128, 128
      %43 = vsyncadd [#allocation6], %s42
      %s45 = sshll.u32 [#allocation7], 4
      %s46 = int_to_ptr.vmem [resolvable:$true] %s45
      %48 = dma.hbm_to_vmem [thread:$0]  %s2, 128, %s46, [#allocation6]
    $region13: #{tpu_custom_call.1} parent=1 // pred_fallthru
      _
    // Predicated region
    $region14: #{tpu_custom_call.1} parent=1 // pred_check
      _
    $region15: #{tpu_custom_call.1} parent=1 // pred_check_branch
      %50 = sbr.rel (0) target = $region17
    $region16: #{tpu_custom_call.1} parent=1 // pred_region
      _
    $region17: #{tpu_custom_call.1} parent=1 // pred_fallthru
      _
    // Predicated region
    $region18: #{tpu_custom_call.1} parent=1 // pred_check
      _
    $region19: #{tpu_custom_call.1} parent=1 // pred_check_branch
      %52 = sbr.rel (0) target = $region21
    $region20: #{tpu_custom_call.1} parent=1 // pred_region
      %s54 = ssub.s32 8192, 8192
      %55 = vsyncadd [#allocation9], %s54
      %s56 = sshll.u32 [#allocation8], 4
      %s57 = int_to_ptr.vmem [resolvable:$true] %s56
      %62 = dma.hbm_to_vmem [thread:$0]  %s4, 8192, %s57, [#allocation9], 64, 64, 4
    $region21: #{tpu_custom_call.1} parent=1 // pred_fallthru
      _
    // Predicated region
    $region22: #{tpu_custom_call.1} parent=1 // pred_check
      _
    $region23: #{tpu_custom_call.1} parent=1 // pred_check_branch
      %64 = sbr.rel (0) target = $region25
    $region24: #{tpu_custom_call.1} parent=1 // pred_region
      _
    $region25: #{tpu_custom_call.1} parent=1 // pred_fallthru
      _
    // Predicated region
    $region26: #{tpu_custom_call.1} parent=1 // pred_check
      _
    $region27: #{tpu_custom_call.1} parent=1 // pred_check_branch
      %66 = sbr.rel (0) target = $region29
    $region28: #{tpu_custom_call.1} parent=1 // pred_region
      %67 = dma.done [#allocation3], 256
    $region29: #{tpu_custom_call.1} parent=1 // pred_fallthru
      _
    // Predicated region
    $region30: #{tpu_custom_call.1} parent=1 // pred_check
      _
    $region31: #{tpu_custom_call.1} parent=1 // pred_check_branch
      %69 = sbr.rel (0) target = $region33
    $region32: #{tpu_custom_call.1} parent=1 // pred_region
      %70 = dma.done [#allocation6], 16384
    $region33: #{tpu_custom_call.1} parent=1 // pred_fallthru
      _
    // Predicated region
    $region34: #{tpu_custom_call.1} parent=1 // pred_check
      _
    $region35: #{tpu_custom_call.1} parent=1 // pred_check_branch
      %72 = sbr.rel (0) target = $region37
    $region36: #{tpu_custom_call.1} parent=1 // pred_region
      %73 = dma.done [#allocation6], 128
    $region37: #{tpu_custom_call.1} parent=1 // pred_fallthru
      _
    // Predicated region
    $region38: #{tpu_custom_call.1} parent=1 // pred_check
      _
    $region39: #{tpu_custom_call.1} parent=1 // pred_check_branch
      %75 = sbr.rel (0) target = $region41
    $region40: #{tpu_custom_call.1} parent=1 // pred_region
      %76 = dma.done [#allocation9], 8192
    $region41: #{tpu_custom_call.1} parent=1 // pred_fallthru
      _
    %v78 = vld [vmem:[#allocation2] sm:$0xff]
    %v79 = vld [vmem:[#allocation2 + $0x8] sm:$0xff]
    %v80 = vld [vmem:[#allocation5] sm:$0xff]
    %v81 = vld [vmem:[#allocation5 + $0x8] sm:$0xff]
    %v82 = vld [vmem:[#allocation5 + $0x10] sm:$0xff]
    %v83 = vld [vmem:[#allocation5 + $0x18] sm:$0xff]
    %v84 = vld [vmem:[#allocation5 + $0x20] sm:$0xff]
    %v85 = vld [vmem:[#allocation5 + $0x28] sm:$0xff]
    %v86 = vld [vmem:[#allocation5 + $0x30] sm:$0xff]
    %v87 = vld [vmem:[#allocation5 + $0x38] sm:$0xff]
    %v88 = vld [vmem:[#allocation5 + $0x40] sm:$0xff]
    %v89 = vld [vmem:[#allocation5 + $0x48] sm:$0xff]
    %v90 = vld [vmem:[#allocation5 + $0x50] sm:$0xff]
    %v91 = vld [vmem:[#allocation5 + $0x58] sm:$0xff]
    %v92 = vld [vmem:[#allocation5 + $0x60] sm:$0xff]
    %v93 = vld [vmem:[#allocation5 + $0x68] sm:$0xff]
    %v94 = vld [vmem:[#allocation5 + $0x70] sm:$0xff]
    %v95 = vld [vmem:[#allocation5 + $0x78] sm:$0xff]
    %v96 = vld [vmem:[#allocation5 + $0x80] sm:$0xff]
    %v97 = vld [vmem:[#allocation5 + $0x88] sm:$0xff]
    %v98 = vld [vmem:[#allocation5 + $0x90] sm:$0xff]
    %v99 = vld [vmem:[#allocation5 + $0x98] sm:$0xff]
    %v100 = vld [vmem:[#allocation5 + $0xa0] sm:$0xff]
    %v101 = vld [vmem:[#allocation5 + $0xa8] sm:$0xff]
    %v102 = vld [vmem:[#allocation5 + $0xb0] sm:$0xff]
    %v103 = vld [vmem:[#allocation5 + $0xb8] sm:$0xff]
    %v104 = vld [vmem:[#allocation5 + $0xc0] sm:$0xff]
    %v105 = vld [vmem:[#allocation5 + $0xc8] sm:$0xff]
    %v106 = vld [vmem:[#allocation5 + $0xd0] sm:$0xff]
    %v107 = vld [vmem:[#allocation5 + $0xd8] sm:$0xff]
    %v108 = vld [vmem:[#allocation5 + $0xe0] sm:$0xff]
    %v109 = vld [vmem:[#allocation5 + $0xe8] sm:$0xff]
    %v110 = vld [vmem:[#allocation5 + $0xf0] sm:$0xff]
    %v111 = vld [vmem:[#allocation5 + $0xf8] sm:$0xff]
    %v112 = vld [vmem:[#allocation5 + $0x100] sm:$0xff]
    %v113 = vld [vmem:[#allocation5 + $0x108] sm:$0xff]
    %v114 = vld [vmem:[#allocation5 + $0x110] sm:$0xff]
    %v115 = vld [vmem:[#allocation5 + $0x118] sm:$0xff]
    %v116 = vld [vmem:[#allocation5 + $0x120] sm:$0xff]
    %v117 = vld [vmem:[#allocation5 + $0x128] sm:$0xff]
    %v118 = vld [vmem:[#allocation5 + $0x130] sm:$0xff]
    %v119 = vld [vmem:[#allocation5 + $0x138] sm:$0xff]
    %v120 = vld [vmem:[#allocation5 + $0x140] sm:$0xff]
    %v121 = vld [vmem:[#allocation5 + $0x148] sm:$0xff]
    %v122 = vld [vmem:[#allocation5 + $0x150] sm:$0xff]
    %v123 = vld [vmem:[#allocation5 + $0x158] sm:$0xff]
    %v124 = vld [vmem:[#allocation5 + $0x160] sm:$0xff]
    %v125 = vld [vmem:[#allocation5 + $0x168] sm:$0xff]
    %v126 = vld [vmem:[#allocation5 + $0x170] sm:$0xff]
    %v127 = vld [vmem:[#allocation5 + $0x178] sm:$0xff]
    %v128 = vld [vmem:[#allocation5 + $0x180] sm:$0xff]
    %v129 = vld [vmem:[#allocation5 + $0x188] sm:$0xff]
    %v130 = vld [vmem:[#allocation5 + $0x190] sm:$0xff]
    %v131 = vld [vmem:[#allocation5 + $0x198] sm:$0xff]
    %v132 = vld [vmem:[#allocation5 + $0x1a0] sm:$0xff]
    %v133 = vld [vmem:[#allocation5 + $0x1a8] sm:$0xff]
    %v134 = vld [vmem:[#allocation5 + $0x1b0] sm:$0xff]
    %v135 = vld [vmem:[#allocation5 + $0x1b8] sm:$0xff]
    %v136 = vld [vmem:[#allocation5 + $0x1c0] sm:$0xff]
    %v137 = vld [vmem:[#allocation5 + $0x1c8] sm:$0xff]
    %v138 = vld [vmem:[#allocation5 + $0x1d0] sm:$0xff]
    %v139 = vld [vmem:[#allocation5 + $0x1d8] sm:$0xff]
    %v140 = vld [vmem:[#allocation5 + $0x1e0] sm:$0xff]
    %v141 = vld [vmem:[#allocation5 + $0x1e8] sm:$0xff]
    %v142 = vld [vmem:[#allocation5 + $0x1f0] sm:$0xff]
    %v143 = vld [vmem:[#allocation5 + $0x1f8] sm:$0xff]
    %v144 = vld [vmem:[#allocation5 + $0x200] sm:$0xff]
    %v145 = vld [vmem:[#allocation5 + $0x208] sm:$0xff]
    %v146 = vld [vmem:[#allocation5 + $0x210] sm:$0xff]
    %v147 = vld [vmem:[#allocation5 + $0x218] sm:$0xff]
    %v148 = vld [vmem:[#allocation5 + $0x220] sm:$0xff]
    %v149 = vld [vmem:[#allocation5 + $0x228] sm:$0xff]
    %v150 = vld [vmem:[#allocation5 + $0x230] sm:$0xff]
    %v151 = vld [vmem:[#allocation5 + $0x238] sm:$0xff]
    %v152 = vld [vmem:[#allocation5 + $0x240] sm:$0xff]
    %v153 = vld [vmem:[#allocation5 + $0x248] sm:$0xff]
    %v154 = vld [vmem:[#allocation5 + $0x250] sm:$0xff]
    %v155 = vld [vmem:[#allocation5 + $0x258] sm:$0xff]
    %v156 = vld [vmem:[#allocation5 + $0x260] sm:$0xff]
    %v157 = vld [vmem:[#allocation5 + $0x268] sm:$0xff]
    %v158 = vld [vmem:[#allocation5 + $0x270] sm:$0xff]
    %v159 = vld [vmem:[#allocation5 + $0x278] sm:$0xff]
    %v160 = vld [vmem:[#allocation5 + $0x280] sm:$0xff]
    %v161 = vld [vmem:[#allocation5 + $0x288] sm:$0xff]
    %v162 = vld [vmem:[#allocation5 + $0x290] sm:$0xff]
    %v163 = vld [vmem:[#allocation5 + $0x298] sm:$0xff]
    %v164 = vld [vmem:[#allocation5 + $0x2a0] sm:$0xff]
    %v165 = vld [vmem:[#allocation5 + $0x2a8] sm:$0xff]
    %v166 = vld [vmem:[#allocation5 + $0x2b0] sm:$0xff]
    %v167 = vld [vmem:[#allocation5 + $0x2b8] sm:$0xff]
    %v168 = vld [vmem:[#allocation5 + $0x2c0] sm:$0xff]
    %v169 = vld [vmem:[#allocation5 + $0x2c8] sm:$0xff]
    %v170 = vld [vmem:[#allocation5 + $0x2d0] sm:$0xff]
    %v171 = vld [vmem:[#allocation5 + $0x2d8] sm:$0xff]
    %v172 = vld [vmem:[#allocation5 + $0x2e0] sm:$0xff]
    %v173 = vld [vmem:[#allocation5 + $0x2e8] sm:$0xff]
    %v174 = vld [vmem:[#allocation5 + $0x2f0] sm:$0xff]
    %v175 = vld [vmem:[#allocation5 + $0x2f8] sm:$0xff]
    %v176 = vld [vmem:[#allocation5 + $0x300] sm:$0xff]
    %v177 = vld [vmem:[#allocation5 + $0x308] sm:$0xff]
    %v178 = vld [vmem:[#allocation5 + $0x310] sm:$0xff]
    %v179 = vld [vmem:[#allocation5 + $0x318] sm:$0xff]
    %v180 = vld [vmem:[#allocation5 + $0x320] sm:$0xff]
    %v181 = vld [vmem:[#allocation5 + $0x328] sm:$0xff]
    %v182 = vld [vmem:[#allocation5 + $0x330] sm:$0xff]
    %v183 = vld [vmem:[#allocation5 + $0x338] sm:$0xff]
    %v184 = vld [vmem:[#allocation5 + $0x340] sm:$0xff]
    %v185 = vld [vmem:[#allocation5 + $0x348] sm:$0xff]
    %v186 = vld [vmem:[#allocation5 + $0x350] sm:$0xff]
    %v187 = vld [vmem:[#allocation5 + $0x358] sm:$0xff]
    %v188 = vld [vmem:[#allocation5 + $0x360] sm:$0xff]
    %v189 = vld [vmem:[#allocation5 + $0x368] sm:$0xff]
    %v190 = vld [vmem:[#allocation5 + $0x370] sm:$0xff]
    %v191 = vld [vmem:[#allocation5 + $0x378] sm:$0xff]
    %v192 = vld [vmem:[#allocation5 + $0x380] sm:$0xff]
    %v193 = vld [vmem:[#allocation5 + $0x388] sm:$0xff]
    %v194 = vld [vmem:[#allocation5 + $0x390] sm:$0xff]
    %v195 = vld [vmem:[#allocation5 + $0x398] sm:$0xff]
    %v196 = vld [vmem:[#allocation5 + $0x3a0] sm:$0xff]
    %v197 = vld [vmem:[#allocation5 + $0x3a8] sm:$0xff]
    %v198 = vld [vmem:[#allocation5 + $0x3b0] sm:$0xff]
    %v199 = vld [vmem:[#allocation5 + $0x3b8] sm:$0xff]
    %v200 = vld [vmem:[#allocation5 + $0x3c0] sm:$0xff]
    %v201 = vld [vmem:[#allocation5 + $0x3c8] sm:$0xff]
    %v202 = vld [vmem:[#allocation5 + $0x3d0] sm:$0xff]
    %v203 = vld [vmem:[#allocation5 + $0x3d8] sm:$0xff]
    %v204 = vld [vmem:[#allocation5 + $0x3e0] sm:$0xff]
    %v205 = vld [vmem:[#allocation5 + $0x3e8] sm:$0xff]
    %v206 = vld [vmem:[#allocation5 + $0x3f0] sm:$0xff]
    %v207 = vld [vmem:[#allocation5 + $0x3f8] sm:$0xff]
    %v210 = vunpack.c.l.b16 %v78
    %v211 = vunpack.c.h.b16 %v78
    %v212 = vunpack.c.l.b16 %v79
    %v213 = vunpack.c.h.b16 %v79
    %v214 = vpack.c.b16 %v212, %v210
    %v215 = vpack.c.b16 %v213, %v211
    %v346 = vunpack.c.l.b16 %v80
    %v347 = vunpack.c.h.b16 %v80
    %v348 = vunpack.c.l.b16 %v81
    %v349 = vunpack.c.h.b16 %v81
    %v350 = vunpack.c.l.b16 %v82
    %v351 = vunpack.c.h.b16 %v82
    %v352 = vunpack.c.l.b16 %v83
    %v353 = vunpack.c.h.b16 %v83
    %v354 = vunpack.c.l.b16 %v84
    %v355 = vunpack.c.h.b16 %v84
    %v356 = vunpack.c.l.b16 %v85
    %v357 = vunpack.c.h.b16 %v85
    %v358 = vunpack.c.l.b16 %v86
    %v359 = vunpack.c.h.b16 %v86
    %v360 = vunpack.c.l.b16 %v87
    %v361 = vunpack.c.h.b16 %v87
    %v362 = vunpack.c.l.b16 %v88
    %v363 = vunpack.c.h.b16 %v88
    %v364 = vunpack.c.l.b16 %v89
    %v365 = vunpack.c.h.b16 %v89
    %v366 = vunpack.c.l.b16 %v90
    %v367 = vunpack.c.h.b16 %v90
    %v368 = vunpack.c.l.b16 %v91
    %v369 = vunpack.c.h.b16 %v91
    %v370 = vunpack.c.l.b16 %v92
    %v371 = vunpack.c.h.b16 %v92
    %v372 = vunpack.c.l.b16 %v93
    %v373 = vunpack.c.h.b16 %v93
    %v374 = vunpack.c.l.b16 %v94
    %v375 = vunpack.c.h.b16 %v94
    %v376 = vunpack.c.l.b16 %v95
    %v377 = vunpack.c.h.b16 %v95
    %v378 = vunpack.c.l.b16 %v96
    %v379 = vunpack.c.h.b16 %v96
    %v380 = vunpack.c.l.b16 %v97
    %v381 = vunpack.c.h.b16 %v97
    %v382 = vunpack.c.l.b16 %v98
    %v383 = vunpack.c.h.b16 %v98
    %v384 = vunpack.c.l.b16 %v99
    %v385 = vunpack.c.h.b16 %v99
    %v386 = vunpack.c.l.b16 %v100
    %v387 = vunpack.c.h.b16 %v100
    %v388 = vunpack.c.l.b16 %v101
    %v389 = vunpack.c.h.b16 %v101
    %v390 = vunpack.c.l.b16 %v102
    %v391 = vunpack.c.h.b16 %v102
    %v392 = vunpack.c.l.b16 %v103
    %v393 = vunpack.c.h.b16 %v103
    %v394 = vunpack.c.l.b16 %v104
    %v395 = vunpack.c.h.b16 %v104
    %v396 = vunpack.c.l.b16 %v105
    %v397 = vunpack.c.h.b16 %v105
    %v398 = vunpack.c.l.b16 %v106
    %v399 = vunpack.c.h.b16 %v106
    %v400 = vunpack.c.l.b16 %v107
    %v401 = vunpack.c.h.b16 %v107
    %v402 = vunpack.c.l.b16 %v108
    %v403 = vunpack.c.h.b16 %v108
    %v404 = vunpack.c.l.b16 %v109
    %v405 = vunpack.c.h.b16 %v109
    %v406 = vunpack.c.l.b16 %v110
    %v407 = vunpack.c.h.b16 %v110
    %v408 = vunpack.c.l.b16 %v111
    %v409 = vunpack.c.h.b16 %v111
    %v410 = vunpack.c.l.b16 %v112
    %v411 = vunpack.c.h.b16 %v112
    %v412 = vunpack.c.l.b16 %v113
    %v413 = vunpack.c.h.b16 %v113
    %v414 = vunpack.c.l.b16 %v114
    %v415 = vunpack.c.h.b16 %v114
    %v416 = vunpack.c.l.b16 %v115
    %v417 = vunpack.c.h.b16 %v115
    %v418 = vunpack.c.l.b16 %v116
    %v419 = vunpack.c.h.b16 %v116
    %v420 = vunpack.c.l.b16 %v117
    %v421 = vunpack.c.h.b16 %v117
    %v422 = vunpack.c.l.b16 %v118
    %v423 = vunpack.c.h.b16 %v118
    %v424 = vunpack.c.l.b16 %v119
    %v425 = vunpack.c.h.b16 %v119
    %v426 = vunpack.c.l.b16 %v120
    %v427 = vunpack.c.h.b16 %v120
    %v428 = vunpack.c.l.b16 %v121
    %v429 = vunpack.c.h.b16 %v121
    %v430 = vunpack.c.l.b16 %v122
    %v431 = vunpack.c.h.b16 %v122
    %v432 = vunpack.c.l.b16 %v123
    %v433 = vunpack.c.h.b16 %v123
    %v434 = vunpack.c.l.b16 %v124
    %v435 = vunpack.c.h.b16 %v124
    %v436 = vunpack.c.l.b16 %v125
    %v437 = vunpack.c.h.b16 %v125
    %v438 = vunpack.c.l.b16 %v126
    %v439 = vunpack.c.h.b16 %v126
    %v440 = vunpack.c.l.b16 %v127
    %v441 = vunpack.c.h.b16 %v127
    %v442 = vunpack.c.l.b16 %v128
    %v443 = vunpack.c.h.b16 %v128
    %v444 = vunpack.c.l.b16 %v129
    %v445 = vunpack.c.h.b16 %v129
    %v446 = vunpack.c.l.b16 %v130
    %v447 = vunpack.c.h.b16 %v130
    %v448 = vunpack.c.l.b16 %v131
    %v449 = vunpack.c.h.b16 %v131
    %v450 = vunpack.c.l.b16 %v132
    %v451 = vunpack.c.h.b16 %v132
    %v452 = vunpack.c.l.b16 %v133
    %v453 = vunpack.c.h.b16 %v133
    %v454 = vunpack.c.l.b16 %v134
    %v455 = vunpack.c.h.b16 %v134
    %v456 = vunpack.c.l.b16 %v135
    %v457 = vunpack.c.h.b16 %v135
    %v458 = vunpack.c.l.b16 %v136
    %v459 = vunpack.c.h.b16 %v136
    %v460 = vunpack.c.l.b16 %v137
    %v461 = vunpack.c.h.b16 %v137
    %v462 = vunpack.c.l.b16 %v138
    %v463 = vunpack.c.h.b16 %v138
    %v464 = vunpack.c.l.b16 %v139
    %v465 = vunpack.c.h.b16 %v139
    %v466 = vunpack.c.l.b16 %v140
    %v467 = vunpack.c.h.b16 %v140
    %v468 = vunpack.c.l.b16 %v141
    %v469 = vunpack.c.h.b16 %v141
    %v470 = vunpack.c.l.b16 %v142
    %v471 = vunpack.c.h.b16 %v142
    %v472 = vunpack.c.l.b16 %v143
    %v473 = vunpack.c.h.b16 %v143
    %v474 = vunpack.c.l.b16 %v144
    %v475 = vunpack.c.h.b16 %v144
    %v476 = vunpack.c.l.b16 %v145
    %v477 = vunpack.c.h.b16 %v145
    %v478 = vunpack.c.l.b16 %v146
    %v479 = vunpack.c.h.b16 %v146
    %v480 = vunpack.c.l.b16 %v147
    %v481 = vunpack.c.h.b16 %v147
    %v482 = vunpack.c.l.b16 %v148
    %v483 = vunpack.c.h.b16 %v148
    %v484 = vunpack.c.l.b16 %v149
    %v485 = vunpack.c.h.b16 %v149
    %v486 = vunpack.c.l.b16 %v150
    %v487 = vunpack.c.h.b16 %v150
    %v488 = vunpack.c.l.b16 %v151
    %v489 = vunpack.c.h.b16 %v151
    %v490 = vunpack.c.l.b16 %v152
    %v491 = vunpack.c.h.b16 %v152
    %v492 = vunpack.c.l.b16 %v153
    %v493 = vunpack.c.h.b16 %v153
    %v494 = vunpack.c.l.b16 %v154
    %v495 = vunpack.c.h.b16 %v154
    %v496 = vunpack.c.l.b16 %v155
    %v497 = vunpack.c.h.b16 %v155
    %v498 = vunpack.c.l.b16 %v156
    %v499 = vunpack.c.h.b16 %v156
    %v500 = vunpack.c.l.b16 %v157
    %v501 = vunpack.c.h.b16 %v157
    %v502 = vunpack.c.l.b16 %v158
    %v503 = vunpack.c.h.b16 %v158
    %v504 = vunpack.c.l.b16 %v159
    %v505 = vunpack.c.h.b16 %v159
    %v506 = vunpack.c.l.b16 %v160
    %v507 = vunpack.c.h.b16 %v160
    %v508 = vunpack.c.l.b16 %v161
    %v509 = vunpack.c.h.b16 %v161
    %v510 = vunpack.c.l.b16 %v162
    %v511 = vunpack.c.h.b16 %v162
    %v512 = vunpack.c.l.b16 %v163
    %v513 = vunpack.c.h.b16 %v163
    %v514 = vunpack.c.l.b16 %v164
    %v515 = vunpack.c.h.b16 %v164
    %v516 = vunpack.c.l.b16 %v165
    %v517 = vunpack.c.h.b16 %v165
    %v518 = vunpack.c.l.b16 %v166
    %v519 = vunpack.c.h.b16 %v166
    %v520 = vunpack.c.l.b16 %v167
    %v521 = vunpack.c.h.b16 %v167
    %v522 = vunpack.c.l.b16 %v168
    %v523 = vunpack.c.h.b16 %v168
    %v524 = vunpack.c.l.b16 %v169
    %v525 = vunpack.c.h.b16 %v169
    %v526 = vunpack.c.l.b16 %v170
    %v527 = vunpack.c.h.b16 %v170
    %v528 = vunpack.c.l.b16 %v171
    %v529 = vunpack.c.h.b16 %v171
    %v530 = vunpack.c.l.b16 %v172
    %v531 = vunpack.c.h.b16 %v172
    %v532 = vunpack.c.l.b16 %v173
    %v533 = vunpack.c.h.b16 %v173
    %v534 = vunpack.c.l.b16 %v174
    %v535 = vunpack.c.h.b16 %v174
    %v536 = vunpack.c.l.b16 %v175
    %v537 = vunpack.c.h.b16 %v175
    %v538 = vunpack.c.l.b16 %v176
    %v539 = vunpack.c.h.b16 %v176
    %v540 = vunpack.c.l.b16 %v177
    %v541 = vunpack.c.h.b16 %v177
    %v542 = vunpack.c.l.b16 %v178
    %v543 = vunpack.c.h.b16 %v178
    %v544 = vunpack.c.l.b16 %v179
    %v545 = vunpack.c.h.b16 %v179
    %v546 = vunpack.c.l.b16 %v180
    %v547 = vunpack.c.h.b16 %v180
    %v548 = vunpack.c.l.b16 %v181
    %v549 = vunpack.c.h.b16 %v181
    %v550 = vunpack.c.l.b16 %v182
    %v551 = vunpack.c.h.b16 %v182
    %v552 = vunpack.c.l.b16 %v183
    %v553 = vunpack.c.h.b16 %v183
    %v554 = vunpack.c.l.b16 %v184
    %v555 = vunpack.c.h.b16 %v184
    %v556 = vunpack.c.l.b16 %v185
    %v557 = vunpack.c.h.b16 %v185
    %v558 = vunpack.c.l.b16 %v186
    %v559 = vunpack.c.h.b16 %v186
    %v560 = vunpack.c.l.b16 %v187
    %v561 = vunpack.c.h.b16 %v187
    %v562 = vunpack.c.l.b16 %v188
    %v563 = vunpack.c.h.b16 %v188
    %v564 = vunpack.c.l.b16 %v189
    %v565 = vunpack.c.h.b16 %v189
    %v566 = vunpack.c.l.b16 %v190
    %v567 = vunpack.c.h.b16 %v190
    %v568 = vunpack.c.l.b16 %v191
    %v569 = vunpack.c.h.b16 %v191
    %v570 = vunpack.c.l.b16 %v192
    %v571 = vunpack.c.h.b16 %v192
    %v572 = vunpack.c.l.b16 %v193
    %v573 = vunpack.c.h.b16 %v193
    %v574 = vunpack.c.l.b16 %v194
    %v575 = vunpack.c.h.b16 %v194
    %v576 = vunpack.c.l.b16 %v195
    %v577 = vunpack.c.h.b16 %v195
    %v578 = vunpack.c.l.b16 %v196
    %v579 = vunpack.c.h.b16 %v196
    %v580 = vunpack.c.l.b16 %v197
    %v581 = vunpack.c.h.b16 %v197
    %v582 = vunpack.c.l.b16 %v198
    %v583 = vunpack.c.h.b16 %v198
    %v584 = vunpack.c.l.b16 %v199
    %v585 = vunpack.c.h.b16 %v199
    %v586 = vunpack.c.l.b16 %v200
    %v587 = vunpack.c.h.b16 %v200
    %v588 = vunpack.c.l.b16 %v201
    %v589 = vunpack.c.h.b16 %v201
    %v590 = vunpack.c.l.b16 %v202
    %v591 = vunpack.c.h.b16 %v202
    %v592 = vunpack.c.l.b16 %v203
    %v593 = vunpack.c.h.b16 %v203
    %v594 = vunpack.c.l.b16 %v204
    %v595 = vunpack.c.h.b16 %v204
    %v596 = vunpack.c.l.b16 %v205
    %v597 = vunpack.c.h.b16 %v205
    %v598 = vunpack.c.l.b16 %v206
    %v599 = vunpack.c.h.b16 %v206
    %v600 = vunpack.c.l.b16 %v207
    %v601 = vunpack.c.h.b16 %v207
    %v602 = vpack.c.b16 %v354, %v346
    %v603 = vpack.c.b16 %v355, %v347
    %v604 = vpack.c.b16 %v356, %v348
    %v605 = vpack.c.b16 %v357, %v349
    %v606 = vpack.c.b16 %v358, %v350
    %v607 = vpack.c.b16 %v359, %v351
    %v608 = vpack.c.b16 %v360, %v352
    %v609 = vpack.c.b16 %v361, %v353
    %v610 = vpack.c.b16 %v370, %v362
    %v611 = vpack.c.b16 %v371, %v363
    %v612 = vpack.c.b16 %v372, %v364
    %v613 = vpack.c.b16 %v373, %v365
    %v614 = vpack.c.b16 %v374, %v366
    %v615 = vpack.c.b16 %v375, %v367
    %v616 = vpack.c.b16 %v376, %v368
    %v617 = vpack.c.b16 %v377, %v369
    %v618 = vpack.c.b16 %v386, %v378
    %v619 = vpack.c.b16 %v387, %v379
    %v620 = vpack.c.b16 %v388, %v380
    %v621 = vpack.c.b16 %v389, %v381
    %v622 = vpack.c.b16 %v390, %v382
    %v623 = vpack.c.b16 %v391, %v383
    %v624 = vpack.c.b16 %v392, %v384
    %v625 = vpack.c.b16 %v393, %v385
    %v626 = vpack.c.b16 %v402, %v394
    %v627 = vpack.c.b16 %v403, %v395
    %v628 = vpack.c.b16 %v404, %v396
    %v629 = vpack.c.b16 %v405, %v397
    %v630 = vpack.c.b16 %v406, %v398
    %v631 = vpack.c.b16 %v407, %v399
    %v632 = vpack.c.b16 %v408, %v400
    %v633 = vpack.c.b16 %v409, %v401
    %v634 = vpack.c.b16 %v418, %v410
    %v635 = vpack.c.b16 %v419, %v411
    %v636 = vpack.c.b16 %v420, %v412
    %v637 = vpack.c.b16 %v421, %v413
    %v638 = vpack.c.b16 %v422, %v414
    %v639 = vpack.c.b16 %v423, %v415
    %v640 = vpack.c.b16 %v424, %v416
    %v641 = vpack.c.b16 %v425, %v417
    %v642 = vpack.c.b16 %v434, %v426
    %v643 = vpack.c.b16 %v435, %v427
    %v644 = vpack.c.b16 %v436, %v428
    %v645 = vpack.c.b16 %v437, %v429
    %v646 = vpack.c.b16 %v438, %v430
    %v647 = vpack.c.b16 %v439, %v431
    %v648 = vpack.c.b16 %v440, %v432
    %v649 = vpack.c.b16 %v441, %v433
    %v650 = vpack.c.b16 %v450, %v442
    %v651 = vpack.c.b16 %v451, %v443
    %v652 = vpack.c.b16 %v452, %v444
    %v653 = vpack.c.b16 %v453, %v445
    %v654 = vpack.c.b16 %v454, %v446
    %v655 = vpack.c.b16 %v455, %v447
    %v656 = vpack.c.b16 %v456, %v448
    %v657 = vpack.c.b16 %v457, %v449
    %v658 = vpack.c.b16 %v466, %v458
    %v659 = vpack.c.b16 %v467, %v459
    %v660 = vpack.c.b16 %v468, %v460
    %v661 = vpack.c.b16 %v469, %v461
    %v662 = vpack.c.b16 %v470, %v462
    %v663 = vpack.c.b16 %v471, %v463
    %v664 = vpack.c.b16 %v472, %v464
    %v665 = vpack.c.b16 %v473, %v465
    %v666 = vpack.c.b16 %v482, %v474
    %v667 = vpack.c.b16 %v483, %v475
    %v668 = vpack.c.b16 %v484, %v476
    %v669 = vpack.c.b16 %v485, %v477
    %v670 = vpack.c.b16 %v486, %v478
    %v671 = vpack.c.b16 %v487, %v479
    %v672 = vpack.c.b16 %v488, %v480
    %v673 = vpack.c.b16 %v489, %v481
    %v674 = vpack.c.b16 %v498, %v490
    %v675 = vpack.c.b16 %v499, %v491
    %v676 = vpack.c.b16 %v500, %v492
    %v677 = vpack.c.b16 %v501, %v493
    %v678 = vpack.c.b16 %v502, %v494
    %v679 = vpack.c.b16 %v503, %v495
    %v680 = vpack.c.b16 %v504, %v496
    %v681 = vpack.c.b16 %v505, %v497
    %v682 = vpack.c.b16 %v514, %v506
    %v683 = vpack.c.b16 %v515, %v507
    %v684 = vpack.c.b16 %v516, %v508
    %v685 = vpack.c.b16 %v517, %v509
    %v686 = vpack.c.b16 %v518, %v510
    %v687 = vpack.c.b16 %v519, %v511
    %v688 = vpack.c.b16 %v520, %v512
    %v689 = vpack.c.b16 %v521, %v513
    %v690 = vpack.c.b16 %v530, %v522
    %v691 = vpack.c.b16 %v531, %v523
    %v692 = vpack.c.b16 %v532, %v524
    %v693 = vpack.c.b16 %v533, %v525
    %v694 = vpack.c.b16 %v534, %v526
    %v695 = vpack.c.b16 %v535, %v527
    %v696 = vpack.c.b16 %v536, %v528
    %v697 = vpack.c.b16 %v537, %v529
    %v698 = vpack.c.b16 %v546, %v538
    %v699 = vpack.c.b16 %v547, %v539
    %v700 = vpack.c.b16 %v548, %v540
    %v701 = vpack.c.b16 %v549, %v541
    %v702 = vpack.c.b16 %v550, %v542
    %v703 = vpack.c.b16 %v551, %v543
    %v704 = vpack.c.b16 %v552, %v544
    %v705 = vpack.c.b16 %v553, %v545
    %v706 = vpack.c.b16 %v562, %v554
    %v707 = vpack.c.b16 %v563, %v555
    %v708 = vpack.c.b16 %v564, %v556
    %v709 = vpack.c.b16 %v565, %v557
    %v710 = vpack.c.b16 %v566, %v558
    %v711 = vpack.c.b16 %v567, %v559
    %v712 = vpack.c.b16 %v568, %v560
    %v713 = vpack.c.b16 %v569, %v561
    %v714 = vpack.c.b16 %v578, %v570
    %v715 = vpack.c.b16 %v579, %v571
    %v716 = vpack.c.b16 %v580, %v572
    %v717 = vpack.c.b16 %v581, %v573
    %v718 = vpack.c.b16 %v582, %v574
    %v719 = vpack.c.b16 %v583, %v575
    %v720 = vpack.c.b16 %v584, %v576
    %v721 = vpack.c.b16 %v585, %v577
    %v722 = vpack.c.b16 %v594, %v586
    %v723 = vpack.c.b16 %v595, %v587
    %v724 = vpack.c.b16 %v596, %v588
    %v725 = vpack.c.b16 %v597, %v589
    %v726 = vpack.c.b16 %v598, %v590
    %v727 = vpack.c.b16 %v599, %v591
    %v728 = vpack.c.b16 %v600, %v592
    %v729 = vpack.c.b16 %v601, %v593
    %858 = vmatprep.subr.bf16.mxu0 %v603
    %859 = vmatpush1.bf16.msra.mxu0 %v602
    %860 = vmatprep.subr.bf16.mxu0 %v611
    %861 = vmatpush1.bf16.msra.mxu0 %v610
    %862 = vmatprep.subr.bf16.mxu0 %v619
    %863 = vmatpush1.bf16.msra.mxu0 %v618
    %864 = vmatprep.subr.bf16.mxu0 %v627
    %865 = vmatpush1.bf16.msra.mxu0 %v626
    %866 = vmatprep.subr.bf16.mxu0 %v635
    %867 = vmatpush1.bf16.msra.mxu0 %v634
    %868 = vmatprep.subr.bf16.mxu0 %v643
    %869 = vmatpush1.bf16.msra.mxu0 %v642
    %870 = vmatprep.subr.bf16.mxu0 %v651
    %871 = vmatpush1.bf16.msra.mxu0 %v650
    %872 = vmatprep.subr.bf16.mxu0 %v659
    %873 = vmatpush1.bf16.msra.mxu0 %v658
    %874 = vmatprep.subr.bf16.mxu0 %v667
    %875 = vmatpush1.bf16.msra.mxu0 %v666
    %876 = vmatprep.subr.bf16.mxu0 %v675
    %877 = vmatpush1.bf16.msra.mxu0 %v674
    %878 = vmatprep.subr.bf16.mxu0 %v683
    %879 = vmatpush1.bf16.msra.mxu0 %v682
    %880 = vmatprep.subr.bf16.mxu0 %v691
    %881 = vmatpush1.bf16.msra.mxu0 %v690
    %882 = vmatprep.subr.bf16.mxu0 %v699
    %883 = vmatpush1.bf16.msra.mxu0 %v698
    %884 = vmatprep.subr.bf16.mxu0 %v707
    %885 = vmatpush1.bf16.msra.mxu0 %v706
    %886 = vmatprep.subr.bf16.mxu0 %v715
    %887 = vmatpush1.bf16.msra.mxu0 %v714
    %888 = vmatprep.subr.bf16.mxu0 %v723
    %889 = vmatpush1.bf16.msra.mxu0 %v722
    %890 = vmatprep.mubr.bf16.mxu0 %v215
    %891 = vmatmul.mubr.bf16.gmra.mrb[0].mxu0 %v214
    %v892 = vpop.f32.mrb[0].mxu0
    %v893 = vadd.f32 0.0, %v892
    %v894 = vpop.f32.mrb[0].mxu0
    %v895 = vadd.f32 0.0, %v894
    %v896 = vpop.f32.mrb[0].mxu0
    %v897 = vadd.f32 0.0, %v896
    %v898 = vpop.f32.mrb[0].mxu0
    %v899 = vadd.f32 0.0, %v898
    %900 = vdwg.mxu0
    %901 = vmatprep.subr.bf16.mxu0 %v605
    %902 = vmatpush1.bf16.msra.mxu0 %v604
    %903 = vmatprep.subr.bf16.mxu0 %v613
    %904 = vmatpush1.bf16.msra.mxu0 %v612
    %905 = vmatprep.subr.bf16.mxu0 %v621
    %906 = vmatpush1.bf16.msra.mxu0 %v620
    %907 = vmatprep.subr.bf16.mxu0 %v629
    %908 = vmatpush1.bf16.msra.mxu0 %v628
    %909 = vmatprep.subr.bf16.mxu0 %v637
    %910 = vmatpush1.bf16.msra.mxu0 %v636
    %911 = vmatprep.subr.bf16.mxu0 %v645
    %912 = vmatpush1.bf16.msra.mxu0 %v644
    %913 = vmatprep.subr.bf16.mxu0 %v653
    %914 = vmatpush1.bf16.msra.mxu0 %v652
    %915 = vmatprep.subr.bf16.mxu0 %v661
    %916 = vmatpush1.bf16.msra.mxu0 %v660
    %917 = vmatprep.subr.bf16.mxu0 %v669
    %918 = vmatpush1.bf16.msra.mxu0 %v668
    %919 = vmatprep.subr.bf16.mxu0 %v677
    %920 = vmatpush1.bf16.msra.mxu0 %v676
    %921 = vmatprep.subr.bf16.mxu0 %v685
    %922 = vmatpush1.bf16.msra.mxu0 %v684
    %923 = vmatprep.subr.bf16.mxu0 %v693
    %924 = vmatpush1.bf16.msra.mxu0 %v692
    %925 = vmatprep.subr.bf16.mxu0 %v701
    %926 = vmatpush1.bf16.msra.mxu0 %v700
    %927 = vmatprep.subr.bf16.mxu0 %v709
    %928 = vmatpush1.bf16.msra.mxu0 %v708
    %929 = vmatprep.subr.bf16.mxu0 %v717
    %930 = vmatpush1.bf16.msra.mxu0 %v716
    %931 = vmatprep.subr.bf16.mxu0 %v725
    %932 = vmatpush1.bf16.msra.mxu0 %v724
    %933 = vmatprep.mubr.bf16.mxu0 %v215
    %934 = vmatmul.mubr.bf16.gmra.mrb[0].mxu0 %v214
    %v935 = vpop.f32.mrb[0].mxu0
    %v936 = vadd.f32 0.0, %v935
    %v937 = vpop.f32.mrb[0].mxu0
    %v938 = vadd.f32 0.0, %v937
    %v939 = vpop.f32.mrb[0].mxu0
    %v940 = vadd.f32 0.0, %v939
    %v941 = vpop.f32.mrb[0].mxu0
    %v942 = vadd.f32 0.0, %v941
    %943 = vdwg.mxu0
    %944 = vmatprep.subr.bf16.mxu0 %v607
    %945 = vmatpush1.bf16.msra.mxu0 %v606
    %946 = vmatprep.subr.bf16.mxu0 %v615
    %947 = vmatpush1.bf16.msra.mxu0 %v614
    %948 = vmatprep.subr.bf16.mxu0 %v623
    %949 = vmatpush1.bf16.msra.mxu0 %v622
    %950 = vmatprep.subr.bf16.mxu0 %v631
    %951 = vmatpush1.bf16.msra.mxu0 %v630
    %952 = vmatprep.subr.bf16.mxu0 %v639
    %953 = vmatpush1.bf16.msra.mxu0 %v638
    %954 = vmatprep.subr.bf16.mxu0 %v647
    %955 = vmatpush1.bf16.msra.mxu0 %v646
    %956 = vmatprep.subr.bf16.mxu0 %v655
    %957 = vmatpush1.bf16.msra.mxu0 %v654
    %958 = vmatprep.subr.bf16.mxu0 %v663
    %959 = vmatpush1.bf16.msra.mxu0 %v662
    %960 = vmatprep.subr.bf16.mxu0 %v671
    %961 = vmatpush1.bf16.msra.mxu0 %v670
    %962 = vmatprep.subr.bf16.mxu0 %v679
    %963 = vmatpush1.bf16.msra.mxu0 %v678
    %964 = vmatprep.subr.bf16.mxu0 %v687
    %965 = vmatpush1.bf16.msra.mxu0 %v686
    %966 = vmatprep.subr.bf16.mxu0 %v695
    %967 = vmatpush1.bf16.msra.mxu0 %v694
    %968 = vmatprep.subr.bf16.mxu0 %v703
    %969 = vmatpush1.bf16.msra.mxu0 %v702
    %970 = vmatprep.subr.bf16.mxu0 %v711
    %971 = vmatpush1.bf16.msra.mxu0 %v710
    %972 = vmatprep.subr.bf16.mxu0 %v719
    %973 = vmatpush1.bf16.msra.mxu0 %v718
    %974 = vmatprep.subr.bf16.mxu0 %v727
    %975 = vmatpush1.bf16.msra.mxu0 %v726
    %976 = vmatprep.mubr.bf16.mxu0 %v215
    %977 = vmatmul.mubr.bf16.gmra.mrb[0].mxu0 %v214
    %v978 = vpop.f32.mrb[0].mxu0
    %v979 = vadd.f32 0.0, %v978
    %v980 = vpop.f32.mrb[0].mxu0
    %v981 = vadd.f32 0.0, %v980
    %v982 = vpop.f32.mrb[0].mxu0
    %v983 = vadd.f32 0.0, %v982
    %v984 = vpop.f32.mrb[0].mxu0
    %v985 = vadd.f32 0.0, %v984
    %986 = vdwg.mxu0
    %987 = vmatprep.subr.bf16.mxu0 %v609
    %988 = vmatpush1.bf16.msra.mxu0 %v608
    %989 = vmatprep.subr.bf16.mxu0 %v617
    %990 = vmatpush1.bf16.msra.mxu0 %v616
    %991 = vmatprep.subr.bf16.mxu0 %v625
    %992 = vmatpush1.bf16.msra.mxu0 %v624
    %993 = vmatprep.subr.bf16.mxu0 %v633
    %994 = vmatpush1.bf16.msra.mxu0 %v632
    %995 = vmatprep.subr.bf16.mxu0 %v641
    %996 = vmatpush1.bf16.msra.mxu0 %v640
    %997 = vmatprep.subr.bf16.mxu0 %v649
    %998 = vmatpush1.bf16.msra.mxu0 %v648
    %999 = vmatprep.subr.bf16.mxu0 %v657
    %1000 = vmatpush1.bf16.msra.mxu0 %v656
    %1001 = vmatprep.subr.bf16.mxu0 %v665
    %1002 = vmatpush1.bf16.msra.mxu0 %v664
    %1003 = vmatprep.subr.bf16.mxu0 %v673
    %1004 = vmatpush1.bf16.msra.mxu0 %v672
    %1005 = vmatprep.subr.bf16.mxu0 %v681
    %1006 = vmatpush1.bf16.msra.mxu0 %v680
    %1007 = vmatprep.subr.bf16.mxu0 %v689
    %1008 = vmatpush1.bf16.msra.mxu0 %v688
    %1009 = vmatprep.subr.bf16.mxu0 %v697
    %1010 = vmatpush1.bf16.msra.mxu0 %v696
    %1011 = vmatprep.subr.bf16.mxu0 %v705
    %1012 = vmatpush1.bf16.msra.mxu0 %v704
    %1013 = vmatprep.subr.bf16.mxu0 %v713
    %1014 = vmatpush1.bf16.msra.mxu0 %v712
    %1015 = vmatprep.subr.bf16.mxu0 %v721
    %1016 = vmatpush1.bf16.msra.mxu0 %v720
    %1017 = vmatprep.subr.bf16.mxu0 %v729
    %1018 = vmatpush1.bf16.msra.mxu0 %v728
    %1019 = vmatprep.mubr.bf16.mxu0 %v215
    %1020 = vmatmul.mubr.bf16.gmra.mrb[0].mxu0 %v214
    %v1021 = vpop.f32.mrb[0].mxu0
    %v1022 = vadd.f32 0.0, %v1021
    %v1023 = vpop.f32.mrb[0].mxu0
    %v1024 = vadd.f32 0.0, %v1023
    %v1025 = vpop.f32.mrb[0].mxu0
    %v1026 = vadd.f32 0.0, %v1025
    %v1027 = vpop.f32.mrb[0].mxu0
    %v1028 = vadd.f32 0.0, %v1027
    %1029 = vdwg.mxu0
    %v1030 = vld [vmem:[#allocation7] sm:$0xff]
    %v1032 = vlaneseq
    %v1033 = vshrl.u32 %v1032, 7
    %v1034 = vsub.s32 0, %v1033
    %v1035 = vrot.slane %v1030, %v1034
    %v1036 = vlaneseq
    %v1037 = vshrl.u32 %v1036, 7
    %v1038 = vsub.s32 1, %v1037
    %v1039 = vrot.slane %v1030, %v1038
    %v1040 = vlaneseq
    %v1041 = vshrl.u32 %v1040, 7
    %v1042 = vsub.s32 2, %v1041
    %v1043 = vrot.slane %v1030, %v1042
    %v1044 = vlaneseq
    %v1045 = vshrl.u32 %v1044, 7
    %v1046 = vsub.s32 3, %v1045
    %v1047 = vrot.slane %v1030, %v1046
    %v1048 = vlaneseq
    %v1049 = vshrl.u32 %v1048, 7
    %v1050 = vsub.s32 4, %v1049
    %v1051 = vrot.slane %v1030, %v1050
    %v1052 = vlaneseq
    %v1053 = vshrl.u32 %v1052, 7
    %v1054 = vsub.s32 5, %v1053
    %v1055 = vrot.slane %v1030, %v1054
    %v1056 = vlaneseq
    %v1057 = vshrl.u32 %v1056, 7
    %v1058 = vsub.s32 6, %v1057
    %v1059 = vrot.slane %v1030, %v1058
    %v1060 = vlaneseq
    %v1061 = vshrl.u32 %v1060, 7
    %v1062 = vsub.s32 7, %v1061
    %v1063 = vrot.slane %v1030, %v1062
    %v1072 = vmul.f32 %v893, %v1035
    %v1073 = vmul.f32 %v895, %v1039
    %v1074 = vmul.f32 %v936, %v1043
    %v1075 = vmul.f32 %v938, %v1047
    %v1076 = vmul.f32 %v979, %v1051
    %v1077 = vmul.f32 %v981, %v1055
    %v1078 = vmul.f32 %v1022, %v1059
    %v1079 = vmul.f32 %v1024, %v1063
    %v1080 = vmul.f32 %v897, %v1035
    %v1081 = vmul.f32 %v899, %v1039
    %v1082 = vmul.f32 %v940, %v1043
    %v1083 = vmul.f32 %v942, %v1047
    %v1084 = vmul.f32 %v983, %v1051
    %v1085 = vmul.f32 %v985, %v1055
    %v1086 = vmul.f32 %v1026, %v1059
    %v1087 = vmul.f32 %v1028, %v1063
    %v1088 = vld [vmem:[%s3] sm:$0xff]
    %v1090 = vlaneseq
    %v1091 = vshrl.u32 %v1090, 7
    %v1092 = vsub.s32 0, %v1091
    %v1093 = vrot.slane %v1088, %v1092
    %v1094 = vlaneseq
    %v1095 = vshrl.u32 %v1094, 7
    %v1096 = vsub.s32 1, %v1095
    %v1097 = vrot.slane %v1088, %v1096
    %v1098 = vlaneseq
    %v1099 = vshrl.u32 %v1098, 7
    %v1100 = vsub.s32 2, %v1099
    %v1101 = vrot.slane %v1088, %v1100
    %v1102 = vlaneseq
    %v1103 = vshrl.u32 %v1102, 7
    %v1104 = vsub.s32 3, %v1103
    %v1105 = vrot.slane %v1088, %v1104
    %v1106 = vlaneseq
    %v1107 = vshrl.u32 %v1106, 7
    %v1108 = vsub.s32 4, %v1107
    %v1109 = vrot.slane %v1088, %v1108
    %v1110 = vlaneseq
    %v1111 = vshrl.u32 %v1110, 7
    %v1112 = vsub.s32 5, %v1111
    %v1113 = vrot.slane %v1088, %v1112
    %v1114 = vlaneseq
    %v1115 = vshrl.u32 %v1114, 7
    %v1116 = vsub.s32 6, %v1115
    %v1117 = vrot.slane %v1088, %v1116
    %v1118 = vlaneseq
    %v1119 = vshrl.u32 %v1118, 7
    %v1120 = vsub.s32 7, %v1119
    %v1121 = vrot.slane %v1088, %v1120
    %v1130 = vadd.f32 %v1072, %v1093
    %v1131 = vadd.f32 %v1073, %v1097
    %v1132 = vadd.f32 %v1074, %v1101
    %v1133 = vadd.f32 %v1075, %v1105
    %v1134 = vadd.f32 %v1076, %v1109
    %v1135 = vadd.f32 %v1077, %v1113
    %v1136 = vadd.f32 %v1078, %v1117
    %v1137 = vadd.f32 %v1079, %v1121
    %v1138 = vadd.f32 %v1080, %v1093
    %v1139 = vadd.f32 %v1081, %v1097
    %v1140 = vadd.f32 %v1082, %v1101
    %v1141 = vadd.f32 %v1083, %v1105
    %v1142 = vadd.f32 %v1084, %v1109
    %v1143 = vadd.f32 %v1085, %v1113
    %v1144 = vadd.f32 %v1086, %v1117
    %v1145 = vadd.f32 %v1087, %v1121
    %v1146 = vmax.f32 %v1130, 0.0
    %v1147 = vmax.f32 %v1131, 0.0
    %v1148 = vmax.f32 %v1132, 0.0
    %v1149 = vmax.f32 %v1133, 0.0
    %v1150 = vmax.f32 %v1134, 0.0
    %v1151 = vmax.f32 %v1135, 0.0
    %v1152 = vmax.f32 %v1136, 0.0
    %v1153 = vmax.f32 %v1137, 0.0
    %v1154 = vmax.f32 %v1138, 0.0
    %v1155 = vmax.f32 %v1139, 0.0
    %v1156 = vmax.f32 %v1140, 0.0
    %v1157 = vmax.f32 %v1141, 0.0
    %v1158 = vmax.f32 %v1142, 0.0
    %v1159 = vmax.f32 %v1143, 0.0
    %v1160 = vmax.f32 %v1144, 0.0
    %v1161 = vmax.f32 %v1145, 0.0
    %v1162 = vpack.c.bf16 %v1154, %v1146
    %v1163 = vpack.c.bf16 %v1155, %v1147
    %v1164 = vpack.c.bf16 %v1156, %v1148
    %v1165 = vpack.c.bf16 %v1157, %v1149
    %v1166 = vpack.c.bf16 %v1158, %v1150
    %v1167 = vpack.c.bf16 %v1159, %v1151
    %v1168 = vpack.c.bf16 %v1160, %v1152
    %v1169 = vpack.c.bf16 %v1161, %v1153
    %v1170 = vld [vmem:[#allocation8] sm:$0xf]
    %v1171 = vld [vmem:[#allocation8 + $0x4] sm:$0xf]
    %v1172 = vld [vmem:[#allocation8 + $0x8] sm:$0xf]
    %v1173 = vld [vmem:[#allocation8 + $0xc] sm:$0xf]
    %v1174 = vld [vmem:[#allocation8 + $0x10] sm:$0xf]
    %v1175 = vld [vmem:[#allocation8 + $0x14] sm:$0xf]
    %v1176 = vld [vmem:[#allocation8 + $0x18] sm:$0xf]
    %v1177 = vld [vmem:[#allocation8 + $0x1c] sm:$0xf]
    %v1178 = vld [vmem:[#allocation8 + $0x20] sm:$0xf]
    %v1179 = vld [vmem:[#allocation8 + $0x24] sm:$0xf]
    %v1180 = vld [vmem:[#allocation8 + $0x28] sm:$0xf]
    %v1181 = vld [vmem:[#allocation8 + $0x2c] sm:$0xf]
    %v1182 = vld [vmem:[#allocation8 + $0x30] sm:$0xf]
    %v1183 = vld [vmem:[#allocation8 + $0x34] sm:$0xf]
    %v1184 = vld [vmem:[#allocation8 + $0x38] sm:$0xf]
    %v1185 = vld [vmem:[#allocation8 + $0x3c] sm:$0xf]
    %v1186 = vld [vmem:[#allocation8 + $0x40] sm:$0xf]
    %v1187 = vld [vmem:[#allocation8 + $0x44] sm:$0xf]
    %v1188 = vld [vmem:[#allocation8 + $0x48] sm:$0xf]
    %v1189 = vld [vmem:[#allocation8 + $0x4c] sm:$0xf]
    %v1190 = vld [vmem:[#allocation8 + $0x50] sm:$0xf]
    %v1191 = vld [vmem:[#allocation8 + $0x54] sm:$0xf]
    %v1192 = vld [vmem:[#allocation8 + $0x58] sm:$0xf]
    %v1193 = vld [vmem:[#allocation8 + $0x5c] sm:$0xf]
    %v1194 = vld [vmem:[#allocation8 + $0x60] sm:$0xf]
    %v1195 = vld [vmem:[#allocation8 + $0x64] sm:$0xf]
    %v1196 = vld [vmem:[#allocation8 + $0x68] sm:$0xf]
    %v1197 = vld [vmem:[#allocation8 + $0x6c] sm:$0xf]
    %v1198 = vld [vmem:[#allocation8 + $0x70] sm:$0xf]
    %v1199 = vld [vmem:[#allocation8 + $0x74] sm:$0xf]
    %v1200 = vld [vmem:[#allocation8 + $0x78] sm:$0xf]
    %v1201 = vld [vmem:[#allocation8 + $0x7c] sm:$0xf]
    %v1202 = vld [vmem:[#allocation8 + $0x80] sm:$0xf]
    %v1203 = vld [vmem:[#allocation8 + $0x84] sm:$0xf]
    %v1204 = vld [vmem:[#allocation8 + $0x88] sm:$0xf]
    %v1205 = vld [vmem:[#allocation8 + $0x8c] sm:$0xf]
    %v1206 = vld [vmem:[#allocation8 + $0x90] sm:$0xf]
    %v1207 = vld [vmem:[#allocation8 + $0x94] sm:$0xf]
    %v1208 = vld [vmem:[#allocation8 + $0x98] sm:$0xf]
    %v1209 = vld [vmem:[#allocation8 + $0x9c] sm:$0xf]
    %v1210 = vld [vmem:[#allocation8 + $0xa0] sm:$0xf]
    %v1211 = vld [vmem:[#allocation8 + $0xa4] sm:$0xf]
    %v1212 = vld [vmem:[#allocation8 + $0xa8] sm:$0xf]
    %v1213 = vld [vmem:[#allocation8 + $0xac] sm:$0xf]
    %v1214 = vld [vmem:[#allocation8 + $0xb0] sm:$0xf]
    %v1215 = vld [vmem:[#allocation8 + $0xb4] sm:$0xf]
    %v1216 = vld [vmem:[#allocation8 + $0xb8] sm:$0xf]
    %v1217 = vld [vmem:[#allocation8 + $0xbc] sm:$0xf]
    %v1218 = vld [vmem:[#allocation8 + $0xc0] sm:$0xf]
    %v1219 = vld [vmem:[#allocation8 + $0xc4] sm:$0xf]
    %v1220 = vld [vmem:[#allocation8 + $0xc8] sm:$0xf]
    %v1221 = vld [vmem:[#allocation8 + $0xcc] sm:$0xf]
    %v1222 = vld [vmem:[#allocation8 + $0xd0] sm:$0xf]
    %v1223 = vld [vmem:[#allocation8 + $0xd4] sm:$0xf]
    %v1224 = vld [vmem:[#allocation8 + $0xd8] sm:$0xf]
    %v1225 = vld [vmem:[#allocation8 + $0xdc] sm:$0xf]
    %v1226 = vld [vmem:[#allocation8 + $0xe0] sm:$0xf]
    %v1227 = vld [vmem:[#allocation8 + $0xe4] sm:$0xf]
    %v1228 = vld [vmem:[#allocation8 + $0xe8] sm:$0xf]
    %v1229 = vld [vmem:[#allocation8 + $0xec] sm:$0xf]
    %v1230 = vld [vmem:[#allocation8 + $0xf0] sm:$0xf]
    %v1231 = vld [vmem:[#allocation8 + $0xf4] sm:$0xf]
    %v1232 = vld [vmem:[#allocation8 + $0xf8] sm:$0xf]
    %v1233 = vld [vmem:[#allocation8 + $0xfc] sm:$0xf]
    %v1234 = vld [vmem:[#allocation8 + $0x100] sm:$0xf]
    %v1235 = vld [vmem:[#allocation8 + $0x104] sm:$0xf]
    %v1236 = vld [vmem:[#allocation8 + $0x108] sm:$0xf]
    %v1237 = vld [vmem:[#allocation8 + $0x10c] sm:$0xf]
    %v1238 = vld [vmem:[#allocation8 + $0x110] sm:$0xf]
    %v1239 = vld [vmem:[#allocation8 + $0x114] sm:$0xf]
    %v1240 = vld [vmem:[#allocation8 + $0x118] sm:$0xf]
    %v1241 = vld [vmem:[#allocation8 + $0x11c] sm:$0xf]
    %v1242 = vld [vmem:[#allocation8 + $0x120] sm:$0xf]
    %v1243 = vld [vmem:[#allocation8 + $0x124] sm:$0xf]
    %v1244 = vld [vmem:[#allocation8 + $0x128] sm:$0xf]
    %v1245 = vld [vmem:[#allocation8 + $0x12c] sm:$0xf]
    %v1246 = vld [vmem:[#allocation8 + $0x130] sm:$0xf]
    %v1247 = vld [vmem:[#allocation8 + $0x134] sm:$0xf]
    %v1248 = vld [vmem:[#allocation8 + $0x138] sm:$0xf]
    %v1249 = vld [vmem:[#allocation8 + $0x13c] sm:$0xf]
    %v1250 = vld [vmem:[#allocation8 + $0x140] sm:$0xf]
    %v1251 = vld [vmem:[#allocation8 + $0x144] sm:$0xf]
    %v1252 = vld [vmem:[#allocation8 + $0x148] sm:$0xf]
    %v1253 = vld [vmem:[#allocation8 + $0x14c] sm:$0xf]
    %v1254 = vld [vmem:[#allocation8 + $0x150] sm:$0xf]
    %v1255 = vld [vmem:[#allocation8 + $0x154] sm:$0xf]
    %v1256 = vld [vmem:[#allocation8 + $0x158] sm:$0xf]
    %v1257 = vld [vmem:[#allocation8 + $0x15c] sm:$0xf]
    %v1258 = vld [vmem:[#allocation8 + $0x160] sm:$0xf]
    %v1259 = vld [vmem:[#allocation8 + $0x164] sm:$0xf]
    %v1260 = vld [vmem:[#allocation8 + $0x168] sm:$0xf]
    %v1261 = vld [vmem:[#allocation8 + $0x16c] sm:$0xf]
    %v1262 = vld [vmem:[#allocation8 + $0x170] sm:$0xf]
    %v1263 = vld [vmem:[#allocation8 + $0x174] sm:$0xf]
    %v1264 = vld [vmem:[#allocation8 + $0x178] sm:$0xf]
    %v1265 = vld [vmem:[#allocation8 + $0x17c] sm:$0xf]
    %v1266 = vld [vmem:[#allocation8 + $0x180] sm:$0xf]
    %v1267 = vld [vmem:[#allocation8 + $0x184] sm:$0xf]
    %v1268 = vld [vmem:[#allocation8 + $0x188] sm:$0xf]
    %v1269 = vld [vmem:[#allocation8 + $0x18c] sm:$0xf]
    %v1270 = vld [vmem:[#allocation8 + $0x190] sm:$0xf]
    %v1271 = vld [vmem:[#allocation8 + $0x194] sm:$0xf]
    %v1272 = vld [vmem:[#allocation8 + $0x198] sm:$0xf]
    %v1273 = vld [vmem:[#allocation8 + $0x19c] sm:$0xf]
    %v1274 = vld [vmem:[#allocation8 + $0x1a0] sm:$0xf]
    %v1275 = vld [vmem:[#allocation8 + $0x1a4] sm:$0xf]
    %v1276 = vld [vmem:[#allocation8 + $0x1a8] sm:$0xf]
    %v1277 = vld [vmem:[#allocation8 + $0x1ac] sm:$0xf]
    %v1278 = vld [vmem:[#allocation8 + $0x1b0] sm:$0xf]
    %v1279 = vld [vmem:[#allocation8 + $0x1b4] sm:$0xf]
    %v1280 = vld [vmem:[#allocation8 + $0x1b8] sm:$0xf]
    %v1281 = vld [vmem:[#allocation8 + $0x1bc] sm:$0xf]
    %v1282 = vld [vmem:[#allocation8 + $0x1c0] sm:$0xf]
    %v1283 = vld [vmem:[#allocation8 + $0x1c4] sm:$0xf]
    %v1284 = vld [vmem:[#allocation8 + $0x1c8] sm:$0xf]
    %v1285 = vld [vmem:[#allocation8 + $0x1cc] sm:$0xf]
    %v1286 = vld [vmem:[#allocation8 + $0x1d0] sm:$0xf]
    %v1287 = vld [vmem:[#allocation8 + $0x1d4] sm:$0xf]
    %v1288 = vld [vmem:[#allocation8 + $0x1d8] sm:$0xf]
    %v1289 = vld [vmem:[#allocation8 + $0x1dc] sm:$0xf]
    %v1290 = vld [vmem:[#allocation8 + $0x1e0] sm:$0xf]
    %v1291 = vld [vmem:[#allocation8 + $0x1e4] sm:$0xf]
    %v1292 = vld [vmem:[#allocation8 + $0x1e8] sm:$0xf]
    %v1293 = vld [vmem:[#allocation8 + $0x1ec] sm:$0xf]
    %v1294 = vld [vmem:[#allocation8 + $0x1f0] sm:$0xf]
    %v1295 = vld [vmem:[#allocation8 + $0x1f4] sm:$0xf]
    %v1296 = vld [vmem:[#allocation8 + $0x1f8] sm:$0xf]
    %v1297 = vld [vmem:[#allocation8 + $0x1fc] sm:$0xf]
    %v1298 = vld [vmem:[%s5] sm:$0x1]
    %v1300 = vlaneseq
    %v1301 = vshrl.u32 %v1300, 7
    %v1302 = vsub.s32 0, %v1301
    %v1303 = vrot.slane %v1298, %v1302
    %v1433 = vunpack.c.l.b16 %v1170
    %v1434 = vunpack.c.l.b16 %v1171
    %v1435 = vunpack.c.l.b16 %v1172
    %v1436 = vunpack.c.l.b16 %v1173
    %v1437 = vunpack.c.l.b16 %v1174
    %v1438 = vunpack.c.l.b16 %v1175
    %v1439 = vunpack.c.l.b16 %v1176
    %v1440 = vunpack.c.l.b16 %v1177
    %v1441 = vunpack.c.l.b16 %v1178
    %v1442 = vunpack.c.l.b16 %v1179
    %v1443 = vunpack.c.l.b16 %v1180
    %v1444 = vunpack.c.l.b16 %v1181
    %v1445 = vunpack.c.l.b16 %v1182
    %v1446 = vunpack.c.l.b16 %v1183
    %v1447 = vunpack.c.l.b16 %v1184
    %v1448 = vunpack.c.l.b16 %v1185
    %v1449 = vunpack.c.l.b16 %v1186
    %v1450 = vunpack.c.l.b16 %v1187
    %v1451 = vunpack.c.l.b16 %v1188
    %v1452 = vunpack.c.l.b16 %v1189
    %v1453 = vunpack.c.l.b16 %v1190
    %v1454 = vunpack.c.l.b16 %v1191
    %v1455 = vunpack.c.l.b16 %v1192
    %v1456 = vunpack.c.l.b16 %v1193
    %v1457 = vunpack.c.l.b16 %v1194
    %v1458 = vunpack.c.l.b16 %v1195
    %v1459 = vunpack.c.l.b16 %v1196
    %v1460 = vunpack.c.l.b16 %v1197
    %v1461 = vunpack.c.l.b16 %v1198
    %v1462 = vunpack.c.l.b16 %v1199
    %v1463 = vunpack.c.l.b16 %v1200
    %v1464 = vunpack.c.l.b16 %v1201
    %v1465 = vunpack.c.l.b16 %v1202
    %v1466 = vunpack.c.l.b16 %v1203
    %v1467 = vunpack.c.l.b16 %v1204
    %v1468 = vunpack.c.l.b16 %v1205
    %v1469 = vunpack.c.l.b16 %v1206
    %v1470 = vunpack.c.l.b16 %v1207
    %v1471 = vunpack.c.l.b16 %v1208
    %v1472 = vunpack.c.l.b16 %v1209
    %v1473 = vunpack.c.l.b16 %v1210
    %v1474 = vunpack.c.l.b16 %v1211
    %v1475 = vunpack.c.l.b16 %v1212
    %v1476 = vunpack.c.l.b16 %v1213
    %v1477 = vunpack.c.l.b16 %v1214
    %v1478 = vunpack.c.l.b16 %v1215
    %v1479 = vunpack.c.l.b16 %v1216
    %v1480 = vunpack.c.l.b16 %v1217
    %v1481 = vunpack.c.l.b16 %v1218
    %v1482 = vunpack.c.l.b16 %v1219
    %v1483 = vunpack.c.l.b16 %v1220
    %v1484 = vunpack.c.l.b16 %v1221
    %v1485 = vunpack.c.l.b16 %v1222
    %v1486 = vunpack.c.l.b16 %v1223
    %v1487 = vunpack.c.l.b16 %v1224
    %v1488 = vunpack.c.l.b16 %v1225
    %v1489 = vunpack.c.l.b16 %v1226
    %v1490 = vunpack.c.l.b16 %v1227
    %v1491 = vunpack.c.l.b16 %v1228
    %v1492 = vunpack.c.l.b16 %v1229
    %v1493 = vunpack.c.l.b16 %v1230
    %v1494 = vunpack.c.l.b16 %v1231
    %v1495 = vunpack.c.l.b16 %v1232
    %v1496 = vunpack.c.l.b16 %v1233
    %v1497 = vunpack.c.l.b16 %v1234
    %v1498 = vunpack.c.l.b16 %v1235
    %v1499 = vunpack.c.l.b16 %v1236
    %v1500 = vunpack.c.l.b16 %v1237
    %v1501 = vunpack.c.l.b16 %v1238
    %v1502 = vunpack.c.l.b16 %v1239
    %v1503 = vunpack.c.l.b16 %v1240
    %v1504 = vunpack.c.l.b16 %v1241
    %v1505 = vunpack.c.l.b16 %v1242
    %v1506 = vunpack.c.l.b16 %v1243
    %v1507 = vunpack.c.l.b16 %v1244
    %v1508 = vunpack.c.l.b16 %v1245
    %v1509 = vunpack.c.l.b16 %v1246
    %v1510 = vunpack.c.l.b16 %v1247
    %v1511 = vunpack.c.l.b16 %v1248
    %v1512 = vunpack.c.l.b16 %v1249
    %v1513 = vunpack.c.l.b16 %v1250
    %v1514 = vunpack.c.l.b16 %v1251
    %v1515 = vunpack.c.l.b16 %v1252
    %v1516 = vunpack.c.l.b16 %v1253
    %v1517 = vunpack.c.l.b16 %v1254
    %v1518 = vunpack.c.l.b16 %v1255
    %v1519 = vunpack.c.l.b16 %v1256
    %v1520 = vunpack.c.l.b16 %v1257
    %v1521 = vunpack.c.l.b16 %v1258
    %v1522 = vunpack.c.l.b16 %v1259
    %v1523 = vunpack.c.l.b16 %v1260
    %v1524 = vunpack.c.l.b16 %v1261
    %v1525 = vunpack.c.l.b16 %v1262
    %v1526 = vunpack.c.l.b16 %v1263
    %v1527 = vunpack.c.l.b16 %v1264
    %v1528 = vunpack.c.l.b16 %v1265
    %v1529 = vunpack.c.l.b16 %v1266
    %v1530 = vunpack.c.l.b16 %v1267
    %v1531 = vunpack.c.l.b16 %v1268
    %v1532 = vunpack.c.l.b16 %v1269
    %v1533 = vunpack.c.l.b16 %v1270
    %v1534 = vunpack.c.l.b16 %v1271
    %v1535 = vunpack.c.l.b16 %v1272
    %v1536 = vunpack.c.l.b16 %v1273
    %v1537 = vunpack.c.l.b16 %v1274
    %v1538 = vunpack.c.l.b16 %v1275
    %v1539 = vunpack.c.l.b16 %v1276
    %v1540 = vunpack.c.l.b16 %v1277
    %v1541 = vunpack.c.l.b16 %v1278
    %v1542 = vunpack.c.l.b16 %v1279
    %v1543 = vunpack.c.l.b16 %v1280
    %v1544 = vunpack.c.l.b16 %v1281
    %v1545 = vunpack.c.l.b16 %v1282
    %v1546 = vunpack.c.l.b16 %v1283
    %v1547 = vunpack.c.l.b16 %v1284
    %v1548 = vunpack.c.l.b16 %v1285
    %v1549 = vunpack.c.l.b16 %v1286
    %v1550 = vunpack.c.l.b16 %v1287
    %v1551 = vunpack.c.l.b16 %v1288
    %v1552 = vunpack.c.l.b16 %v1289
    %v1553 = vunpack.c.l.b16 %v1290
    %v1554 = vunpack.c.l.b16 %v1291
    %v1555 = vunpack.c.l.b16 %v1292
    %v1556 = vunpack.c.l.b16 %v1293
    %v1557 = vunpack.c.l.b16 %v1294
    %v1558 = vunpack.c.l.b16 %v1295
    %v1559 = vunpack.c.l.b16 %v1296
    %v1560 = vunpack.c.l.b16 %v1297
    %v1561 = vpack.c.b16 %v1434, %v1433
    %v1562 = vpack.c.b16 %v1436, %v1435
    %v1563 = vpack.c.b16 %v1438, %v1437
    %v1564 = vpack.c.b16 %v1440, %v1439
    %v1565 = vpack.c.b16 %v1442, %v1441
    %v1566 = vpack.c.b16 %v1444, %v1443
    %v1567 = vpack.c.b16 %v1446, %v1445
    %v1568 = vpack.c.b16 %v1448, %v1447
    %v1569 = vpack.c.b16 %v1450, %v1449
    %v1570 = vpack.c.b16 %v1452, %v1451
    %v1571 = vpack.c.b16 %v1454, %v1453
    %v1572 = vpack.c.b16 %v1456, %v1455
    %v1573 = vpack.c.b16 %v1458, %v1457
    %v1574 = vpack.c.b16 %v1460, %v1459
    %v1575 = vpack.c.b16 %v1462, %v1461
    %v1576 = vpack.c.b16 %v1464, %v1463
    %v1577 = vpack.c.b16 %v1466, %v1465
    %v1578 = vpack.c.b16 %v1468, %v1467
    %v1579 = vpack.c.b16 %v1470, %v1469
    %v1580 = vpack.c.b16 %v1472, %v1471
    %v1581 = vpack.c.b16 %v1474, %v1473
    %v1582 = vpack.c.b16 %v1476, %v1475
    %v1583 = vpack.c.b16 %v1478, %v1477
    %v1584 = vpack.c.b16 %v1480, %v1479
    %v1585 = vpack.c.b16 %v1482, %v1481
    %v1586 = vpack.c.b16 %v1484, %v1483
    %v1587 = vpack.c.b16 %v1486, %v1485
    %v1588 = vpack.c.b16 %v1488, %v1487
    %v1589 = vpack.c.b16 %v1490, %v1489
    %v1590 = vpack.c.b16 %v1492, %v1491
    %v1591 = vpack.c.b16 %v1494, %v1493
    %v1592 = vpack.c.b16 %v1496, %v1495
    %v1593 = vpack.c.b16 %v1498, %v1497
    %v1594 = vpack.c.b16 %v1500, %v1499
    %v1595 = vpack.c.b16 %v1502, %v1501
    %v1596 = vpack.c.b16 %v1504, %v1503
    %v1597 = vpack.c.b16 %v1506, %v1505
    %v1598 = vpack.c.b16 %v1508, %v1507
    %v1599 = vpack.c.b16 %v1510, %v1509
    %v1600 = vpack.c.b16 %v1512, %v1511
    %v1601 = vpack.c.b16 %v1514, %v1513
    %v1602 = vpack.c.b16 %v1516, %v1515
    %v1603 = vpack.c.b16 %v1518, %v1517
    %v1604 = vpack.c.b16 %v1520, %v1519
    %v1605 = vpack.c.b16 %v1522, %v1521
    %v1606 = vpack.c.b16 %v1524, %v1523
    %v1607 = vpack.c.b16 %v1526, %v1525
    %v1608 = vpack.c.b16 %v1528, %v1527
    %v1609 = vpack.c.b16 %v1530, %v1529
    %v1610 = vpack.c.b16 %v1532, %v1531
    %v1611 = vpack.c.b16 %v1534, %v1533
    %v1612 = vpack.c.b16 %v1536, %v1535
    %v1613 = vpack.c.b16 %v1538, %v1537
    %v1614 = vpack.c.b16 %v1540, %v1539
    %v1615 = vpack.c.b16 %v1542, %v1541
    %v1616 = vpack.c.b16 %v1544, %v1543
    %v1617 = vpack.c.b16 %v1546, %v1545
    %v1618 = vpack.c.b16 %v1548, %v1547
    %v1619 = vpack.c.b16 %v1550, %v1549
    %v1620 = vpack.c.b16 %v1552, %v1551
    %v1621 = vpack.c.b16 %v1554, %v1553
    %v1622 = vpack.c.b16 %v1556, %v1555
    %v1623 = vpack.c.b16 %v1558, %v1557
    %v1624 = vpack.c.b16 %v1560, %v1559
    %1689 = vmatprep.subr.bf16.mxu0 0
    %1690 = vmatpush1.bf16.msra.mxu0 %v1561
    %1691 = vmatprep.subr.bf16.mxu0 0
    %1692 = vmatpush1.bf16.msra.mxu0 %v1562
    %1693 = vmatprep.subr.bf16.mxu0 0
    %1694 = vmatpush1.bf16.msra.mxu0 %v1563
    %1695 = vmatprep.subr.bf16.mxu0 0
    %1696 = vmatpush1.bf16.msra.mxu0 %v1564
    %1697 = vmatprep.subr.bf16.mxu0 0
    %1698 = vmatpush1.bf16.msra.mxu0 %v1565
    %1699 = vmatprep.subr.bf16.mxu0 0
    %1700 = vmatpush1.bf16.msra.mxu0 %v1566
    %1701 = vmatprep.subr.bf16.mxu0 0
    %1702 = vmatpush1.bf16.msra.mxu0 %v1567
    %1703 = vmatprep.subr.bf16.mxu0 0
    %1704 = vmatpush1.bf16.msra.mxu0 %v1568
    %1705 = vmatprep.subr.bf16.mxu0 0
    %1706 = vmatpush1.bf16.msra.mxu0 %v1569
    %1707 = vmatprep.subr.bf16.mxu0 0
    %1708 = vmatpush1.bf16.msra.mxu0 %v1570
    %1709 = vmatprep.subr.bf16.mxu0 0
    %1710 = vmatpush1.bf16.msra.mxu0 %v1571
    %1711 = vmatprep.subr.bf16.mxu0 0
    %1712 = vmatpush1.bf16.msra.mxu0 %v1572
    %1713 = vmatprep.subr.bf16.mxu0 0
    %1714 = vmatpush1.bf16.msra.mxu0 %v1573
    %1715 = vmatprep.subr.bf16.mxu0 0
    %1716 = vmatpush1.bf16.msra.mxu0 %v1574
    %1717 = vmatprep.subr.bf16.mxu0 0
    %1718 = vmatpush1.bf16.msra.mxu0 %v1575
    %1719 = vmatprep.subr.bf16.mxu0 0
    %1720 = vmatpush1.bf16.msra.mxu0 %v1576
    %1721 = vmatprep.mubr.bf16.mxu0 %v1163
    %1722 = vmatmul.mubr.bf16.gmra.mrb[0].mxu0 %v1162
    %v1723 = vpop.f32.mrb[0].mxu0
    %v1724 = vadd.f32 %v1303, %v1723
    %v1725 = vpop.f32.mrb[0].mxu0
    %v1726 = vpop.f32.mrb[0].mxu0
    %v1727 = vadd.f32 %v1303, %v1726
    %v1728 = vpop.f32.mrb[0].mxu0
    %1729 = vdwg.mxu0
    %1730 = vmatprep.subr.bf16.mxu0 0
    %1731 = vmatpush1.bf16.msra.mxu0 %v1577
    %1732 = vmatprep.subr.bf16.mxu0 0
    %1733 = vmatpush1.bf16.msra.mxu0 %v1578
    %1734 = vmatprep.subr.bf16.mxu0 0
    %1735 = vmatpush1.bf16.msra.mxu0 %v1579
    %1736 = vmatprep.subr.bf16.mxu0 0
    %1737 = vmatpush1.bf16.msra.mxu0 %v1580
    %1738 = vmatprep.subr.bf16.mxu0 0
    %1739 = vmatpush1.bf16.msra.mxu0 %v1581
    %1740 = vmatprep.subr.bf16.mxu0 0
    %1741 = vmatpush1.bf16.msra.mxu0 %v1582
    %1742 = vmatprep.subr.bf16.mxu0 0
    %1743 = vmatpush1.bf16.msra.mxu0 %v1583
    %1744 = vmatprep.subr.bf16.mxu0 0
    %1745 = vmatpush1.bf16.msra.mxu0 %v1584
    %1746 = vmatprep.subr.bf16.mxu0 0
    %1747 = vmatpush1.bf16.msra.mxu0 %v1585
    %1748 = vmatprep.subr.bf16.mxu0 0
    %1749 = vmatpush1.bf16.msra.mxu0 %v1586
    %1750 = vmatprep.subr.bf16.mxu0 0
    %1751 = vmatpush1.bf16.msra.mxu0 %v1587
    %1752 = vmatprep.subr.bf16.mxu0 0
    %1753 = vmatpush1.bf16.msra.mxu0 %v1588
    %1754 = vmatprep.subr.bf16.mxu0 0
    %1755 = vmatpush1.bf16.msra.mxu0 %v1589
    %1756 = vmatprep.subr.bf16.mxu0 0
    %1757 = vmatpush1.bf16.msra.mxu0 %v1590
    %1758 = vmatprep.subr.bf16.mxu0 0
    %1759 = vmatpush1.bf16.msra.mxu0 %v1591
    %1760 = vmatprep.subr.bf16.mxu0 0
    %1761 = vmatpush1.bf16.msra.mxu0 %v1592
    %1762 = vmatprep.mubr.bf16.mxu0 %v1165
    %1763 = vmatmul.mubr.bf16.gmra.mrb[0].mxu0 %v1164
    %v1764 = vpop.f32.mrb[0].mxu0
    %v1765 = vadd.f32 %v1724, %v1764
    %v1766 = vpop.f32.mrb[0].mxu0
    %v1767 = vpop.f32.mrb[0].mxu0
    %v1768 = vadd.f32 %v1727, %v1767
    %v1769 = vpop.f32.mrb[0].mxu0
    %1770 = vdwg.mxu0
    %1771 = vmatprep.subr.bf16.mxu0 0
    %1772 = vmatpush1.bf16.msra.mxu0 %v1593
    %1773 = vmatprep.subr.bf16.mxu0 0
    %1774 = vmatpush1.bf16.msra.mxu0 %v1594
    %1775 = vmatprep.subr.bf16.mxu0 0
    %1776 = vmatpush1.bf16.msra.mxu0 %v1595
    %1777 = vmatprep.subr.bf16.mxu0 0
    %1778 = vmatpush1.bf16.msra.mxu0 %v1596
    %1779 = vmatprep.subr.bf16.mxu0 0
    %1780 = vmatpush1.bf16.msra.mxu0 %v1597
    %1781 = vmatprep.subr.bf16.mxu0 0
    %1782 = vmatpush1.bf16.msra.mxu0 %v1598
    %1783 = vmatprep.subr.bf16.mxu0 0
    %1784 = vmatpush1.bf16.msra.mxu0 %v1599
    %1785 = vmatprep.subr.bf16.mxu0 0
    %1786 = vmatpush1.bf16.msra.mxu0 %v1600
    %1787 = vmatprep.subr.bf16.mxu0 0
    %1788 = vmatpush1.bf16.msra.mxu0 %v1601
    %1789 = vmatprep.subr.bf16.mxu0 0
    %1790 = vmatpush1.bf16.msra.mxu0 %v1602
    %1791 = vmatprep.subr.bf16.mxu0 0
    %1792 = vmatpush1.bf16.msra.mxu0 %v1603
    %1793 = vmatprep.subr.bf16.mxu0 0
    %1794 = vmatpush1.bf16.msra.mxu0 %v1604
    %1795 = vmatprep.subr.bf16.mxu0 0
    %1796 = vmatpush1.bf16.msra.mxu0 %v1605
    %1797 = vmatprep.subr.bf16.mxu0 0
    %1798 = vmatpush1.bf16.msra.mxu0 %v1606
    %1799 = vmatprep.subr.bf16.mxu0 0
    %1800 = vmatpush1.bf16.msra.mxu0 %v1607
    %1801 = vmatprep.subr.bf16.mxu0 0
    %1802 = vmatpush1.bf16.msra.mxu0 %v1608
    %1803 = vmatprep.mubr.bf16.mxu0 %v1167
    %1804 = vmatmul.mubr.bf16.gmra.mrb[0].mxu0 %v1166
    %v1805 = vpop.f32.mrb[0].mxu0
    %v1806 = vadd.f32 %v1765, %v1805
    %v1807 = vpop.f32.mrb[0].mxu0
    %v1808 = vpop.f32.mrb[0].mxu0
    %v1809 = vadd.f32 %v1768, %v1808
    %v1810 = vpop.f32.mrb[0].mxu0
    %1811 = vdwg.mxu0
    %1812 = vmatprep.subr.bf16.mxu0 0
    %1813 = vmatpush1.bf16.msra.mxu0 %v1609
    %1814 = vmatprep.subr.bf16.mxu0 0
    %1815 = vmatpush1.bf16.msra.mxu0 %v1610
    %1816 = vmatprep.subr.bf16.mxu0 0
    %1817 = vmatpush1.bf16.msra.mxu0 %v1611
    %1818 = vmatprep.subr.bf16.mxu0 0
    %1819 = vmatpush1.bf16.msra.mxu0 %v1612
    %1820 = vmatprep.subr.bf16.mxu0 0
    %1821 = vmatpush1.bf16.msra.mxu0 %v1613
    %1822 = vmatprep.subr.bf16.mxu0 0
    %1823 = vmatpush1.bf16.msra.mxu0 %v1614
    %1824 = vmatprep.subr.bf16.mxu0 0
    %1825 = vmatpush1.bf16.msra.mxu0 %v1615
    %1826 = vmatprep.subr.bf16.mxu0 0
    %1827 = vmatpush1.bf16.msra.mxu0 %v1616
    %1828 = vmatprep.subr.bf16.mxu0 0
    %1829 = vmatpush1.bf16.msra.mxu0 %v1617
    %1830 = vmatprep.subr.bf16.mxu0 0
    %1831 = vmatpush1.bf16.msra.mxu0 %v1618
    %1832 = vmatprep.subr.bf16.mxu0 0
    %1833 = vmatpush1.bf16.msra.mxu0 %v1619
    %1834 = vmatprep.subr.bf16.mxu0 0
    %1835 = vmatpush1.bf16.msra.mxu0 %v1620
    %1836 = vmatprep.subr.bf16.mxu0 0
    %1837 = vmatpush1.bf16.msra.mxu0 %v1621
    %1838 = vmatprep.subr.bf16.mxu0 0
    %1839 = vmatpush1.bf16.msra.mxu0 %v1622
    %1840 = vmatprep.subr.bf16.mxu0 0
    %1841 = vmatpush1.bf16.msra.mxu0 %v1623
    %1842 = vmatprep.subr.bf16.mxu0 0
    %1843 = vmatpush1.bf16.msra.mxu0 %v1624
    %1844 = vmatprep.mubr.bf16.mxu0 %v1169
    %1845 = vmatmul.mubr.bf16.gmra.mrb[0].mxu0 %v1168
    %v1846 = vpop.f32.mrb[0].mxu0
    %v1847 = vadd.f32 %v1806, %v1846
    %v1848 = vpop.f32.mrb[0].mxu0
    %v1849 = vpop.f32.mrb[0].mxu0
    %v1850 = vadd.f32 %v1809, %v1849
    %v1851 = vpop.f32.mrb[0].mxu0
    %1852 = vdwg.mxu0
    %v1853 = vxor.u32 %v1847, 2147483648
    %v1854 = vxor.u32 %v1850, 2147483648
    %v1855 = vmul.f32 %v1853, 1.442695
    %v1856 = vpow.pop %v1855
    %v1857 = vmul.f32 %v1854, 1.442695
    %v1858 = vpow.pop %v1857
    %v1859 = vadd.f32 %v1856, 1.0
    %v1860 = vadd.f32 %v1858, 1.0
    %v1861 = vrcp.pop %v1859
    %v1862 = vmul.f32 1.0, %v1861
    %v1863 = vrcp.pop %v1860
    %v1864 = vmul.f32 1.0, %v1863
    %1865 = vst [vmem:[#allocation10] sm:$0xff] %v1862
    %1866 = vst [vmem:[#allocation10 + $0x8] sm:$0xff] %v1864
    // Predicated region
    $region42: #{tpu_custom_call.1} parent=1 // pred_check
      _
    $region43: #{tpu_custom_call.1} parent=1 // pred_check_branch
      %1868 = sbr.rel (0) target = $region45
    $region44: #{tpu_custom_call.1} parent=1 // pred_region
      %s1870 = ssub.s32 256, 256
      %1871 = vsyncadd [#allocation4], %s1870
      %s1872 = sshll.u32 [#allocation10], 4
      %s1873 = int_to_ptr.vmem [resolvable:$true] %s1872
      %1878 = dma.vmem_to_hbm [thread:$0]  %s1873, 256, %s6, [#allocation4], 128, 128, 8
    $region45: #{tpu_custom_call.1} parent=1 // pred_fallthru
      _
    // Predicated region
    $region46: #{tpu_custom_call.1} parent=1 // pred_check
      _
    $region47: #{tpu_custom_call.1} parent=1 // pred_check_branch
      %1880 = sbr.rel (0) target = $region49
    $region48: #{tpu_custom_call.1} parent=1 // pred_region
      %1881 = dma.done [#allocation4], 256
    $region49: #{tpu_custom_call.1} parent=1 // pred_fallthru
      _
    %1882 = vsyncpa [#allocation3], 1
    %1883 = vsyncpa [#allocation6], 1
    %1884 = vsyncpa [#allocation9], 1
    %1885 = vsyncpa [#allocation4], 1

</llo_original>
